<compile_context>
chip_gen: v7x
topology: tpu7x:2x2x1
jax: 0.10.0
libtpu: 0.0.40
codegen_flags: <defaults>
</compile_context>

<pallas_src>
import functools

import jax
import jax.numpy as jnp
from jax.experimental import pallas as pl
from jax.experimental.pallas import tpu as pltpu

F32 = jnp.float32
BF16 = jnp.bfloat16
SUB = 8      # f32 sublane granule
LANE = 128   # lane width


# ----------------------------- Pallas kernel ------------------------------ #
def _make_kernel(n_layers, Bp, T, D_in, PRE, H, OUTP):
    """Kernel closure for fixed (static) shapes.

    Ref order:
      inputs : x_tm (T*Bp, D_in) bf16, w_pre (D_in, PRE) bf16, b_pre (1, PRE) f32,
               [w_ih (in_l, 4H) bf16, w_hh (H, 4H) bf16, bias (1, 4H) f32] * L,
               w_fc (H, OUTP) bf16, b_fc (1, OUTP) f32,
               h0 (L, Bp, H) f32, c0 (L, Bp, H) f32
      outputs: out (Bp, OUTP) f32, h_n (L, Bp, H) f32, c_n (L, Bp, H) f32
      scratch: seq_scr (T*Bp, H) f32 VMEM
    """
    GH = 4 * H

    def kernel(*refs):
        it = iter(refs)
        x_ref = next(it)
        w_pre_ref = next(it)
        b_pre_ref = next(it)
        layer_refs = [(next(it), next(it), next(it)) for _ in range(n_layers)]
        w_fc_ref = next(it)
        b_fc_ref = next(it)
        h0_ref = next(it)
        c0_ref = next(it)
        out_ref = next(it)
        hn_ref = next(it)
        cn_ref = next(it)
        seq_scr = next(it)

        # pre_fc + relu: ONE (T*Bp, D_in) @ (D_in, PRE) bf16 matmul, f32 acc.
        pre = jnp.dot(x_ref[...], w_pre_ref[...],
                      preferred_element_type=F32) + b_pre_ref[...]
        seq = jnp.maximum(pre, 0.0)                       # (T*Bp, PRE) f32

        # Lane-id mask marking the `g` segment of the packed (Bp, 4H) gates.
        lane = jax.lax.broadcasted_iota(jnp.int32, (Bp, GH), 1)
        is_g = (lane >= 2 * H) & (lane < 3 * H)

        h_top = None
        for l in range(n_layers):
            w_ih_ref, w_hh_ref, bias_ref = layer_refs[l]

            # Hoisted input projection for ALL time steps + fused b_ih+b_hh.
            xw = jnp.dot(seq.astype(BF16), w_ih_ref[...],
                         preferred_element_type=F32) + bias_ref[...]
            xw = xw.reshape(T, Bp, GH)                    # time-major slabs

            w_hh = w_hh_ref[...]                          # (H, 4H) bf16 fused
            h = h0_ref[l]                                 # (Bp, H) f32
            c = c0_ref[l]                                 # (Bp, H) f32

            # T is a small static constant -> Python unroll is fine here.
            # TODO(synk): lax.fori_loop + chunked xw double-buffer if T grows.
            for t in range(T):
                # Single lane-dense recurrent matmul per step (bf16 -> f32).
                gates = xw[t] + jnp.dot(h.astype(BF16), w_hh,
                                        preferred_element_type=F32)  # (Bp,4H)
                # Packed activation: one sigmoid pass + one tanh pass.
                act = jnp.where(is_g, jnp.tanh(gates), jax.nn.sigmoid(gates))
                gi = act[:, 0 * H:1 * H]
                gf = act[:, 1 * H:2 * H]
                gg = act[:, 2 * H:3 * H]
                go = act[:, 3 * H:4 * H]
                c = gf * c + gi * gg
                h = go * jnp.tanh(c)
                if l < n_layers - 1:
                    seq_scr[pl.ds(t * Bp, Bp), :] = h     # time-major rows

            hn_ref[l] = h
            cn_ref[l] = c
            if l < n_layers - 1:
                seq = seq_scr[...]                        # (T*Bp, H) f32
            else:
                h_top = h

        # fc on the last step of the top layer (lane-dense, padded OUTP).
        out = jnp.dot(h_top.astype(BF16), w_fc_ref[...],
                      preferred_element_type=F32) + b_fc_ref[...]
        out_ref[...] = out

    return kernel


# ------------------------- one-time weight packing ------------------------- #
def pack_params(params, n_layers, hidden_dim):
    """Host-side, once: transpose, fuse biases, pad fc lanes, cast to bf16."""
    H = hidden_dim
    D_out = params["w_fc"].shape[0]
    OUTP = ((D_out + LANE - 1) // LANE) * LANE
    packed = {
        "w_pre": params["w_pre"].astype(F32).T.astype(BF16),          # (D_in, PRE)
        "b_pre": params["b_pre"].astype(F32).reshape(1, -1),          # (1, PRE)
        "w_fc": jnp.zeros((H, OUTP), BF16).at[:, :D_out].set(
            params["w_fc"].astype(F32).T.astype(BF16)),               # (H, OUTP)
        "b_fc": jnp.zeros((1, OUTP), F32).at[:, :D_out].set(
            params["b_fc"].astype(F32)),                              # (1, OUTP)
    }
    for l in range(n_layers):
        packed[f"w_ih_{l}"] = params[f"w_ih_{l}"].astype(F32).T.astype(BF16)  # (in_l,4H)
        packed[f"w_hh_{l}"] = params[f"w_hh_{l}"].astype(F32).T.astype(BF16)  # (H,4H)
        packed[f"bias_{l}"] = (params[f"b_ih_{l}"] +
                               params[f"b_hh_{l}"]).astype(F32).reshape(1, -1)
    return packed


# ------------------------------ JAX wrapper ------------------------------- #
def enhanced_lstm_forward(x, packed, hidden, *, d_out):
    """x: (B, T, D_in); hidden: (h0, c0) each (n_layers, B, H)."""
    B, T, D_in = x.shape
    h0, c0 = hidden
    n_layers, _, H = h0.shape
    PRE = packed["w_pre"].shape[1]
    OUTP = packed["w_fc"].shape[1]
    Bp = ((B + SUB - 1) // SUB) * SUB          # pad batch to sublane granule

    # Pad batch, flatten time-major, bf16 activations for the MXU.
    xp = jnp.zeros((Bp, T, D_in), BF16).at[:B].set(x.astype(BF16))
    x_tm = jnp.transpose(xp, (1, 0, 2)).reshape(T * Bp, D_in)
    h0p = jnp.zeros((n_layers, Bp, H), F32).at[:, :B].set(h0.astype(F32))
    c0p = jnp.zeros((n_layers, Bp, H), F32).at[:, :B].set(c0.astype(F32))

    flat_inputs = [x_tm, packed["w_pre"], packed["b_pre"]]
    for l in range(n_layers):
        flat_inputs += [packed[f"w_ih_{l}"], packed[f"w_hh_{l}"], packed[f"bias_{l}"]]
    flat_inputs += [packed["w_fc"], packed["b_fc"], h0p, c0p]

    kernel = _make_kernel(n_layers, Bp, T, D_in, PRE, H, OUTP)
    vmem = pl.BlockSpec(memory_space=pltpu.MemorySpace.VMEM)
    out_shapes = (
        jax.ShapeDtypeStruct((Bp, OUTP), F32),
        jax.ShapeDtypeStruct((n_layers, Bp, H), F32),
        jax.ShapeDtypeStruct((n_layers, Bp, H), F32),
    )
    out_p, hn_p, cn_p = pl.pallas_call(
        kernel,
        out_shape=out_shapes,
        in_specs=[vmem] * len(flat_inputs),
        out_specs=(vmem, vmem, vmem),
        scratch_shapes=[pltpu.VMEM((T * Bp, H), F32)],
        # VMEM footprint here is <1 MiB; set vmem_limit_bytes only if shapes grow
        # (v5e default scoped limit is 16 MiB).
    )(*flat_inputs)

    # Slice padding away (batch pad + fc lane pad).
    return out_p[:B, :d_out], (hn_p[:, :B, :], cn_p[:, :B, :])


# --------------------------- pure-JAX reference ---------------------------- #
def reference_forward(x, params, hidden):
    h0, c0 = hidden
    n_layers, _, H = h0.shape
    pre = jax.nn.relu(jnp.einsum("btd,ed->bte", x, params["w_pre"]) + params["b_pre"])
    seq = pre
    hn, cn = [], []
    for l in range(n_layers):
        w_ih, w_hh = params[f"w_ih_{l}"], params[f"w_hh_{l}"]
        b_ih, b_hh = params[f"b_ih_{l}"], params[f"b_hh_{l}"]
        h, c = h0[l], c0[l]
        outs = []
        for t in range(seq.shape[1]):
            g = seq[:, t, :] @ w_ih.T + b_ih + h @ w_hh.T + b_hh
            i = jax.nn.sigmoid(g[:, 0 * H:1 * H])
            f = jax.nn.sigmoid(g[:, 1 * H:2 * H])
            gg = jnp.tanh(g[:, 2 * H:3 * H])
            o = jax.nn.sigmoid(g[:, 3 * H:4 * H])
            c = f * c + i * gg
            h = o * jnp.tanh(c)
            outs.append(h)
        seq = jnp.stack(outs, axis=1)
        hn.append(h)
        cn.append(c)
    out = seq[:, -1, :] @ params["w_fc"].T + params["b_fc"]
    return out, (jnp.stack(hn), jnp.stack(cn))


# --------------------------------- main ------------------------------------ #
if __name__ == "__main__":
    # Small shapes consistent with the module (pre_fc output is fixed to 16).
    B, T = 2, 8
    input_dim, pre_dim, hidden_dim, output_dim, n_layers = 4, 16, 32, 2, 2

    key = jax.random.PRNGKey(0)
    ks = iter(jax.random.split(key, 32))

    def init(shape, scale=0.3):
        return (scale * jax.random.normal(next(ks), shape)).astype(jnp.float32)

    params = {
        "w_pre": init((pre_dim, input_dim)),
        "b_pre": init((pre_dim,)),
        "w_fc": init((output_dim, hidden_dim)),
        "b_fc": init((output_dim,)),
    }
    for l in range(n_layers):
        in_l = pre_dim if l == 0 else hidden_dim
        params[f"w_ih_{l}"] = init((4 * hidden_dim, in_l))
        params[f"w_hh_{l}"] = init((4 * hidden_dim, hidden_dim))
        params[f"b_ih_{l}"] = init((4 * hidden_dim,))
        params[f"b_hh_{l}"] = init((4 * hidden_dim,))

    x = jax.random.normal(next(ks), (B, T, input_dim), dtype=jnp.float32)
    # init_hidden(batch_size=B)
    hidden = (
        jnp.zeros((n_layers, B, hidden_dim), jnp.float32),
        jnp.zeros((n_layers, B, hidden_dim), jnp.float32),
    )

    # One-time weight packing outside the jitted forward (perf feedback).
    packed = pack_params(params, n_layers, hidden_dim)

    fwd = jax.jit(functools.partial(enhanced_lstm_forward, d_out=output_dim))
    out, (h_n, c_n) = fwd(x, packed, hidden)
    jax.block_until_ready((out, h_n, c_n))

    ref_out, (ref_h, ref_c) = reference_forward(x, params, hidden)
    assert out.shape == ref_out.shape and h_n.shape == ref_h.shape
    # bf16 MXU operands (f32 accumulate) against the f32 reference: loosened atol.
    assert jnp.allclose(out, ref_out, atol=8e-2), "output mismatch"
    assert jnp.allclose(h_n, ref_h, atol=5e-2), "h_n mismatch"
    assert jnp.allclose(c_n, ref_c, atol=5e-2), "c_n mismatch"

    print("KERNEL_OK")
</pallas_src>

<mosaic_0001>
module attributes {stable_mosaic.version = 11 : i64} {
  func.func @kernel(%arg0: memref<64x4xbf16, #tpu.memory_space<vmem>>, %arg1: memref<4x16xbf16, #tpu.memory_space<vmem>>, %arg2: memref<1x16xf32, #tpu.memory_space<vmem>>, %arg3: memref<16x128xbf16, #tpu.memory_space<vmem>>, %arg4: memref<32x128xbf16, #tpu.memory_space<vmem>>, %arg5: memref<1x128xf32, #tpu.memory_space<vmem>>, %arg6: memref<32x128xbf16, #tpu.memory_space<vmem>>, %arg7: memref<32x128xbf16, #tpu.memory_space<vmem>>, %arg8: memref<1x128xf32, #tpu.memory_space<vmem>>, %arg9: memref<32x128xbf16, #tpu.memory_space<vmem>>, %arg10: memref<1x128xf32, #tpu.memory_space<vmem>>, %arg11: memref<2x8x32xf32, #tpu.memory_space<vmem>>, %arg12: memref<2x8x32xf32, #tpu.memory_space<vmem>>, %arg13: memref<8x128xf32, #tpu.memory_space<vmem>>, %arg14: memref<2x8x32xf32, #tpu.memory_space<vmem>>, %arg15: memref<2x8x32xf32, #tpu.memory_space<vmem>>, %arg16: memref<64x32xf32, #tpu.memory_space<vmem>>) attributes {dimension_semantics = [], scalar_prefetch = 0 : i64, scratch_operands = 1 : i64, tpu.core_type = #tpu.core_type<tc>} {
    %c0 = arith.constant 0 : index
    %c0_0 = arith.constant 0 : index
    %0 = vector.load %arg0[%c0, %c0_0] : memref<64x4xbf16, #tpu.memory_space<vmem>>, vector<64x4xbf16>
    %c0_1 = arith.constant 0 : index
    %c0_2 = arith.constant 0 : index
    %1 = vector.load %arg1[%c0_1, %c0_2] : memref<4x16xbf16, #tpu.memory_space<vmem>>, vector<4x16xbf16>
    %cst = arith.constant dense<0.000000e+00> : vector<64x16xf32>
    %2 = tpu.matmul %0, %1, %cst {dimension_numbers = #tpu.dot_dimension_numbers<[1], [0], [0], [1], [0, 0, 1, 1], [], []>} : vector<64x4xbf16>, vector<4x16xbf16>, vector<64x16xf32> -> vector<64x16xf32>
    %c0_3 = arith.constant 0 : index
    %c0_4 = arith.constant 0 : index
    %3 = vector.load %arg2[%c0_3, %c0_4] : memref<1x16xf32, #tpu.memory_space<vmem>>, vector<1x16xf32>
    %4 = vector.broadcast %3 : vector<1x16xf32> to vector<64x16xf32>
    %5 = arith.addf %2, %4 : vector<64x16xf32>
    %cst_5 = arith.constant 0.000000e+00 : f32
    %6 = vector.broadcast %cst_5 : f32 to vector<64x16xf32>
    %7 = arith.maximumf %5, %6 : vector<64x16xf32>
    %8 = tpu.iota {dimensions = array<i32: 1>} : vector<8x128xi32>
    %c64_i32 = arith.constant 64 : i32
    %9 = vector.broadcast %c64_i32 : i32 to vector<8x128xi32>
    %10 = arith.cmpi sge, %8, %9 : vector<8x128xi32>
    %c96_i32 = arith.constant 96 : i32
    %11 = vector.broadcast %c96_i32 : i32 to vector<8x128xi32>
    %12 = arith.cmpi slt, %8, %11 : vector<8x128xi32>
    %13 = arith.andi %10, %12 : vector<8x128xi1>
    %14 = arith.truncf %7 : vector<64x16xf32> to vector<64x16xbf16>
    %c0_6 = arith.constant 0 : index
    %c0_7 = arith.constant 0 : index
    %15 = vector.load %arg3[%c0_6, %c0_7] : memref<16x128xbf16, #tpu.memory_space<vmem>>, vector<16x128xbf16>
    %cst_8 = arith.constant dense<0.000000e+00> : vector<64x128xf32>
    %16 = tpu.matmul %14, %15, %cst_8 {dimension_numbers = #tpu.dot_dimension_numbers<[1], [0], [0], [1], [0, 0, 1, 1], [], []>} : vector<64x16xbf16>, vector<16x128xbf16>, vector<64x128xf32> -> vector<64x128xf32>
    %c0_9 = arith.constant 0 : index
    %c0_10 = arith.constant 0 : index
    %17 = vector.load %arg5[%c0_9, %c0_10] : memref<1x128xf32, #tpu.memory_space<vmem>>, vector<1x128xf32>
    %18 = vector.broadcast %17 : vector<1x128xf32> to vector<64x128xf32>
    %19 = arith.addf %16, %18 : vector<64x128xf32>
    %20 = vector.shape_cast %19 : vector<64x128xf32> to vector<8x8x128xf32>
    %c0_11 = arith.constant 0 : index
    %c0_12 = arith.constant 0 : index
    %21 = vector.load %arg4[%c0_11, %c0_12] : memref<32x128xbf16, #tpu.memory_space<vmem>>, vector<32x128xbf16>
    %c0_13 = arith.constant 0 : index
    %c0_14 = arith.constant 0 : index
    %c0_15 = arith.constant 0 : index
    %22 = vector.load %arg11[%c0_13, %c0_14, %c0_15] : memref<2x8x32xf32, #tpu.memory_space<vmem>>, vector<1x8x32xf32>
    %23 = vector.shape_cast %22 : vector<1x8x32xf32> to vector<8x32xf32>
    %c0_16 = arith.constant 0 : index
    %c0_17 = arith.constant 0 : index
    %c0_18 = arith.constant 0 : index
    %24 = vector.load %arg12[%c0_16, %c0_17, %c0_18] : memref<2x8x32xf32, #tpu.memory_space<vmem>>, vector<1x8x32xf32>
    %25 = vector.shape_cast %24 : vector<1x8x32xf32> to vector<8x32xf32>
    %26 = vector.extract_strided_slice %20 {offsets = [0, 0, 0], sizes = [1, 8, 128], strides = [1, 1, 1]} : vector<8x8x128xf32> to vector<1x8x128xf32>
    %27 = vector.shape_cast %26 : vector<1x8x128xf32> to vector<8x128xf32>
    %28 = arith.truncf %23 : vector<8x32xf32> to vector<8x32xbf16>
    %cst_19 = arith.constant dense<0.000000e+00> : vector<8x128xf32>
    %29 = tpu.matmul %28, %21, %cst_19 {dimension_numbers = #tpu.dot_dimension_numbers<[1], [0], [0], [1], [0, 0, 1, 1], [], []>} : vector<8x32xbf16>, vector<32x128xbf16>, vector<8x128xf32> -> vector<8x128xf32>
    %30 = arith.addf %27, %29 : vector<8x128xf32>
    %31 = math.tanh %30 : vector<8x128xf32>
    %32 = arith.negf %30 : vector<8x128xf32>
    %33 = math.exp %32 : vector<8x128xf32>
    %cst_20 = arith.constant 1.000000e+00 : f32
    %34 = vector.broadcast %cst_20 : f32 to vector<8x128xf32>
    %35 = arith.addf %34, %33 : vector<8x128xf32>
    %36 = arith.divf %34, %35 : vector<8x128xf32>
    %37 = arith.select %13, %31, %36 : vector<8x128xi1>, vector<8x128xf32>
    %38 = vector.extract_strided_slice %37 {offsets = [0, 0], sizes = [8, 32], strides = [1, 1]} : vector<8x128xf32> to vector<8x32xf32>
    %39 = vector.extract_strided_slice %37 {offsets = [0, 32], sizes = [8, 32], strides = [1, 1]} : vector<8x128xf32> to vector<8x32xf32>
    %40 = vector.extract_strided_slice %37 {offsets = [0, 64], sizes = [8, 32], strides = [1, 1]} : vector<8x128xf32> to vector<8x32xf32>
    %41 = vector.extract_strided_slice %37 {offsets = [0, 96], sizes = [8, 32], strides = [1, 1]} : vector<8x128xf32> to vector<8x32xf32>
    %42 = arith.mulf %39, %25 : vector<8x32xf32>
    %43 = arith.mulf %38, %40 : vector<8x32xf32>
    %44 = arith.addf %42, %43 : vector<8x32xf32>
    %45 = math.tanh %44 : vector<8x32xf32>
    %46 = arith.mulf %41, %45 : vector<8x32xf32>
    %c0_21 = arith.constant 0 : index
    %c0_22 = arith.constant 0 : index
    %47 = vector.load %arg16[%c0_21, %c0_22] : memref<64x32xf32, #tpu.memory_space<vmem>>, vector<8x32xf32>
    tpu.vector_store %arg16[%c0_21, %c0_22], %46 {strides = array<i32>} : memref<64x32xf32, #tpu.memory_space<vmem>>, vector<8x32xf32>,
    %48 = vector.extract_strided_slice %20 {offsets = [1, 0, 0], sizes = [1, 8, 128], strides = [1, 1, 1]} : vector<8x8x128xf32> to vector<1x8x128xf32>
    %49 = vector.shape_cast %48 : vector<1x8x128xf32> to vector<8x128xf32>
    %50 = arith.truncf %46 : vector<8x32xf32> to vector<8x32xbf16>
    %cst_23 = arith.constant dense<0.000000e+00> : vector<8x128xf32>
    %51 = tpu.matmul %50, %21, %cst_23 {dimension_numbers = #tpu.dot_dimension_numbers<[1], [0], [0], [1], [0, 0, 1, 1], [], []>} : vector<8x32xbf16>, vector<32x128xbf16>, vector<8x128xf32> -> vector<8x128xf32>
    %52 = arith.addf %49, %51 : vector<8x128xf32>
    %53 = math.tanh %52 : vector<8x128xf32>
    %54 = arith.negf %52 : vector<8x128xf32>
    %55 = math.exp %54 : vector<8x128xf32>
    %cst_24 = arith.constant 1.000000e+00 : f32
    %56 = vector.broadcast %cst_24 : f32 to vector<8x128xf32>
    %57 = arith.addf %56, %55 : vector<8x128xf32>
    %58 = arith.divf %56, %57 : vector<8x128xf32>
    %59 = arith.select %13, %53, %58 : vector<8x128xi1>, vector<8x128xf32>
    %60 = vector.extract_strided_slice %59 {offsets = [0, 0], sizes = [8, 32], strides = [1, 1]} : vector<8x128xf32> to vector<8x32xf32>
    %61 = vector.extract_strided_slice %59 {offsets = [0, 32], sizes = [8, 32], strides = [1, 1]} : vector<8x128xf32> to vector<8x32xf32>
    %62 = vector.extract_strided_slice %59 {offsets = [0, 64], sizes = [8, 32], strides = [1, 1]} : vector<8x128xf32> to vector<8x32xf32>
    %63 = vector.extract_strided_slice %59 {offsets = [0, 96], sizes = [8, 32], strides = [1, 1]} : vector<8x128xf32> to vector<8x32xf32>
    %64 = arith.mulf %61, %44 : vector<8x32xf32>
    %65 = arith.mulf %60, %62 : vector<8x32xf32>
    %66 = arith.addf %64, %65 : vector<8x32xf32>
    %67 = math.tanh %66 : vector<8x32xf32>
    %68 = arith.mulf %63, %67 : vector<8x32xf32>
    %c8 = arith.constant 8 : index
    %c0_25 = arith.constant 0 : index
    %69 = vector.load %arg16[%c8, %c0_25] : memref<64x32xf32, #tpu.memory_space<vmem>>, vector<8x32xf32>
    tpu.vector_store %arg16[%c8, %c0_25], %68 {strides = array<i32>} : memref<64x32xf32, #tpu.memory_space<vmem>>, vector<8x32xf32>,
    %70 = vector.extract_strided_slice %20 {offsets = [2, 0, 0], sizes = [1, 8, 128], strides = [1, 1, 1]} : vector<8x8x128xf32> to vector<1x8x128xf32>
    %71 = vector.shape_cast %70 : vector<1x8x128xf32> to vector<8x128xf32>
    %72 = arith.truncf %68 : vector<8x32xf32> to vector<8x32xbf16>
    %cst_26 = arith.constant dense<0.000000e+00> : vector<8x128xf32>
    %73 = tpu.matmul %72, %21, %cst_26 {dimension_numbers = #tpu.dot_dimension_numbers<[1], [0], [0], [1], [0, 0, 1, 1], [], []>} : vector<8x32xbf16>, vector<32x128xbf16>, vector<8x128xf32> -> vector<8x128xf32>
    %74 = arith.addf %71, %73 : vector<8x128xf32>
    %75 = math.tanh %74 : vector<8x128xf32>
    %76 = arith.negf %74 : vector<8x128xf32>
    %77 = math.exp %76 : vector<8x128xf32>
    %cst_27 = arith.constant 1.000000e+00 : f32
    %78 = vector.broadcast %cst_27 : f32 to vector<8x128xf32>
    %79 = arith.addf %78, %77 : vector<8x128xf32>
    %80 = arith.divf %78, %79 : vector<8x128xf32>
    %81 = arith.select %13, %75, %80 : vector<8x128xi1>, vector<8x128xf32>
    %82 = vector.extract_strided_slice %81 {offsets = [0, 0], sizes = [8, 32], strides = [1, 1]} : vector<8x128xf32> to vector<8x32xf32>
    %83 = vector.extract_strided_slice %81 {offsets = [0, 32], sizes = [8, 32], strides = [1, 1]} : vector<8x128xf32> to vector<8x32xf32>
    %84 = vector.extract_strided_slice %81 {offsets = [0, 64], sizes = [8, 32], strides = [1, 1]} : vector<8x128xf32> to vector<8x32xf32>
    %85 = vector.extract_strided_slice %81 {offsets = [0, 96], sizes = [8, 32], strides = [1, 1]} : vector<8x128xf32> to vector<8x32xf32>
    %86 = arith.mulf %83, %66 : vector<8x32xf32>
    %87 = arith.mulf %82, %84 : vector<8x32xf32>
    %88 = arith.addf %86, %87 : vector<8x32xf32>
    %89 = math.tanh %88 : vector<8x32xf32>
    %90 = arith.mulf %85, %89 : vector<8x32xf32>
    %c16 = arith.constant 16 : index
    %c0_28 = arith.constant 0 : index
    %91 = vector.load %arg16[%c16, %c0_28] : memref<64x32xf32, #tpu.memory_space<vmem>>, vector<8x32xf32>
    tpu.vector_store %arg16[%c16, %c0_28], %90 {strides = array<i32>} : memref<64x32xf32, #tpu.memory_space<vmem>>, vector<8x32xf32>,
    %92 = vector.extract_strided_slice %20 {offsets = [3, 0, 0], sizes = [1, 8, 128], strides = [1, 1, 1]} : vector<8x8x128xf32> to vector<1x8x128xf32>
    %93 = vector.shape_cast %92 : vector<1x8x128xf32> to vector<8x128xf32>
    %94 = arith.truncf %90 : vector<8x32xf32> to vector<8x32xbf16>
    %cst_29 = arith.constant dense<0.000000e+00> : vector<8x128xf32>
    %95 = tpu.matmul %94, %21, %cst_29 {dimension_numbers = #tpu.dot_dimension_numbers<[1], [0], [0], [1], [0, 0, 1, 1], [], []>} : vector<8x32xbf16>, vector<32x128xbf16>, vector<8x128xf32> -> vector<8x128xf32>
    %96 = arith.addf %93, %95 : vector<8x128xf32>
    %97 = math.tanh %96 : vector<8x128xf32>
    %98 = arith.negf %96 : vector<8x128xf32>
    %99 = math.exp %98 : vector<8x128xf32>
    %cst_30 = arith.constant 1.000000e+00 : f32
    %100 = vector.broadcast %cst_30 : f32 to vector<8x128xf32>
    %101 = arith.addf %100, %99 : vector<8x128xf32>
    %102 = arith.divf %100, %101 : vector<8x128xf32>
    %103 = arith.select %13, %97, %102 : vector<8x128xi1>, vector<8x128xf32>
    %104 = vector.extract_strided_slice %103 {offsets = [0, 0], sizes = [8, 32], strides = [1, 1]} : vector<8x128xf32> to vector<8x32xf32>
    %105 = vector.extract_strided_slice %103 {offsets = [0, 32], sizes = [8, 32], strides = [1, 1]} : vector<8x128xf32> to vector<8x32xf32>
    %106 = vector.extract_strided_slice %103 {offsets = [0, 64], sizes = [8, 32], strides = [1, 1]} : vector<8x128xf32> to vector<8x32xf32>
    %107 = vector.extract_strided_slice %103 {offsets = [0, 96], sizes = [8, 32], strides = [1, 1]} : vector<8x128xf32> to vector<8x32xf32>
    %108 = arith.mulf %105, %88 : vector<8x32xf32>
    %109 = arith.mulf %104, %106 : vector<8x32xf32>
    %110 = arith.addf %108, %109 : vector<8x32xf32>
    %111 = math.tanh %110 : vector<8x32xf32>
    %112 = arith.mulf %107, %111 : vector<8x32xf32>
    %c24 = arith.constant 24 : index
    %c0_31 = arith.constant 0 : index
    %113 = vector.load %arg16[%c24, %c0_31] : memref<64x32xf32, #tpu.memory_space<vmem>>, vector<8x32xf32>
    tpu.vector_store %arg16[%c24, %c0_31], %112 {strides = array<i32>} : memref<64x32xf32, #tpu.memory_space<vmem>>, vector<8x32xf32>,
    %114 = vector.extract_strided_slice %20 {offsets = [4, 0, 0], sizes = [1, 8, 128], strides = [1, 1, 1]} : vector<8x8x128xf32> to vector<1x8x128xf32>
    %115 = vector.shape_cast %114 : vector<1x8x128xf32> to vector<8x128xf32>
    %116 = arith.truncf %112 : vector<8x32xf32> to vector<8x32xbf16>
    %cst_32 = arith.constant dense<0.000000e+00> : vector<8x128xf32>
    %117 = tpu.matmul %116, %21, %cst_32 {dimension_numbers = #tpu.dot_dimension_numbers<[1], [0], [0], [1], [0, 0, 1, 1], [], []>} : vector<8x32xbf16>, vector<32x128xbf16>, vector<8x128xf32> -> vector<8x128xf32>
    %118 = arith.addf %115, %117 : vector<8x128xf32>
    %119 = math.tanh %118 : vector<8x128xf32>
    %120 = arith.negf %118 : vector<8x128xf32>
    %121 = math.exp %120 : vector<8x128xf32>
    %cst_33 = arith.constant 1.000000e+00 : f32
    %122 = vector.broadcast %cst_33 : f32 to vector<8x128xf32>
    %123 = arith.addf %122, %121 : vector<8x128xf32>
    %124 = arith.divf %122, %123 : vector<8x128xf32>
    %125 = arith.select %13, %119, %124 : vector<8x128xi1>, vector<8x128xf32>
    %126 = vector.extract_strided_slice %125 {offsets = [0, 0], sizes = [8, 32], strides = [1, 1]} : vector<8x128xf32> to vector<8x32xf32>
    %127 = vector.extract_strided_slice %125 {offsets = [0, 32], sizes = [8, 32], strides = [1, 1]} : vector<8x128xf32> to vector<8x32xf32>
    %128 = vector.extract_strided_slice %125 {offsets = [0, 64], sizes = [8, 32], strides = [1, 1]} : vector<8x128xf32> to vector<8x32xf32>
    %129 = vector.extract_strided_slice %125 {offsets = [0, 96], sizes = [8, 32], strides = [1, 1]} : vector<8x128xf32> to vector<8x32xf32>
    %130 = arith.mulf %127, %110 : vector<8x32xf32>
    %131 = arith.mulf %126, %128 : vector<8x32xf32>
    %132 = arith.addf %130, %131 : vector<8x32xf32>
    %133 = math.tanh %132 : vector<8x32xf32>
    %134 = arith.mulf %129, %133 : vector<8x32xf32>
    %c32 = arith.constant 32 : index
    %c0_34 = arith.constant 0 : index
    %135 = vector.load %arg16[%c32, %c0_34] : memref<64x32xf32, #tpu.memory_space<vmem>>, vector<8x32xf32>
    tpu.vector_store %arg16[%c32, %c0_34], %134 {strides = array<i32>} : memref<64x32xf32, #tpu.memory_space<vmem>>, vector<8x32xf32>,
    %136 = vector.extract_strided_slice %20 {offsets = [5, 0, 0], sizes = [1, 8, 128], strides = [1, 1, 1]} : vector<8x8x128xf32> to vector<1x8x128xf32>
    %137 = vector.shape_cast %136 : vector<1x8x128xf32> to vector<8x128xf32>
    %138 = arith.truncf %134 : vector<8x32xf32> to vector<8x32xbf16>
    %cst_35 = arith.constant dense<0.000000e+00> : vector<8x128xf32>
    %139 = tpu.matmul %138, %21, %cst_35 {dimension_numbers = #tpu.dot_dimension_numbers<[1], [0], [0], [1], [0, 0, 1, 1], [], []>} : vector<8x32xbf16>, vector<32x128xbf16>, vector<8x128xf32> -> vector<8x128xf32>
    %140 = arith.addf %137, %139 : vector<8x128xf32>
    %141 = math.tanh %140 : vector<8x128xf32>
    %142 = arith.negf %140 : vector<8x128xf32>
    %143 = math.exp %142 : vector<8x128xf32>
    %cst_36 = arith.constant 1.000000e+00 : f32
    %144 = vector.broadcast %cst_36 : f32 to vector<8x128xf32>
    %145 = arith.addf %144, %143 : vector<8x128xf32>
    %146 = arith.divf %144, %145 : vector<8x128xf32>
    %147 = arith.select %13, %141, %146 : vector<8x128xi1>, vector<8x128xf32>
    %148 = vector.extract_strided_slice %147 {offsets = [0, 0], sizes = [8, 32], strides = [1, 1]} : vector<8x128xf32> to vector<8x32xf32>
    %149 = vector.extract_strided_slice %147 {offsets = [0, 32], sizes = [8, 32], strides = [1, 1]} : vector<8x128xf32> to vector<8x32xf32>
    %150 = vector.extract_strided_slice %147 {offsets = [0, 64], sizes = [8, 32], strides = [1, 1]} : vector<8x128xf32> to vector<8x32xf32>
    %151 = vector.extract_strided_slice %147 {offsets = [0, 96], sizes = [8, 32], strides = [1, 1]} : vector<8x128xf32> to vector<8x32xf32>
    %152 = arith.mulf %149, %132 : vector<8x32xf32>
    %153 = arith.mulf %148, %150 : vector<8x32xf32>
    %154 = arith.addf %152, %153 : vector<8x32xf32>
    %155 = math.tanh %154 : vector<8x32xf32>
    %156 = arith.mulf %151, %155 : vector<8x32xf32>
    %c40 = arith.constant 40 : index
    %c0_37 = arith.constant 0 : index
    %157 = vector.load %arg16[%c40, %c0_37] : memref<64x32xf32, #tpu.memory_space<vmem>>, vector<8x32xf32>
    tpu.vector_store %arg16[%c40, %c0_37], %156 {strides = array<i32>} : memref<64x32xf32, #tpu.memory_space<vmem>>, vector<8x32xf32>,
    %158 = vector.extract_strided_slice %20 {offsets = [6, 0, 0], sizes = [1, 8, 128], strides = [1, 1, 1]} : vector<8x8x128xf32> to vector<1x8x128xf32>
    %159 = vector.shape_cast %158 : vector<1x8x128xf32> to vector<8x128xf32>
    %160 = arith.truncf %156 : vector<8x32xf32> to vector<8x32xbf16>
    %cst_38 = arith.constant dense<0.000000e+00> : vector<8x128xf32>
    %161 = tpu.matmul %160, %21, %cst_38 {dimension_numbers = #tpu.dot_dimension_numbers<[1], [0], [0], [1], [0, 0, 1, 1], [], []>} : vector<8x32xbf16>, vector<32x128xbf16>, vector<8x128xf32> -> vector<8x128xf32>
    %162 = arith.addf %159, %161 : vector<8x128xf32>
    %163 = math.tanh %162 : vector<8x128xf32>
    %164 = arith.negf %162 : vector<8x128xf32>
    %165 = math.exp %164 : vector<8x128xf32>
    %cst_39 = arith.constant 1.000000e+00 : f32
    %166 = vector.broadcast %cst_39 : f32 to vector<8x128xf32>
    %167 = arith.addf %166, %165 : vector<8x128xf32>
    %168 = arith.divf %166, %167 : vector<8x128xf32>
    %169 = arith.select %13, %163, %168 : vector<8x128xi1>, vector<8x128xf32>
    %170 = vector.extract_strided_slice %169 {offsets = [0, 0], sizes = [8, 32], strides = [1, 1]} : vector<8x128xf32> to vector<8x32xf32>
    %171 = vector.extract_strided_slice %169 {offsets = [0, 32], sizes = [8, 32], strides = [1, 1]} : vector<8x128xf32> to vector<8x32xf32>
    %172 = vector.extract_strided_slice %169 {offsets = [0, 64], sizes = [8, 32], strides = [1, 1]} : vector<8x128xf32> to vector<8x32xf32>
    %173 = vector.extract_strided_slice %169 {offsets = [0, 96], sizes = [8, 32], strides = [1, 1]} : vector<8x128xf32> to vector<8x32xf32>
    %174 = arith.mulf %171, %154 : vector<8x32xf32>
    %175 = arith.mulf %170, %172 : vector<8x32xf32>
    %176 = arith.addf %174, %175 : vector<8x32xf32>
    %177 = math.tanh %176 : vector<8x32xf32>
    %178 = arith.mulf %173, %177 : vector<8x32xf32>
    %c48 = arith.constant 48 : index
    %c0_40 = arith.constant 0 : index
    %179 = vector.load %arg16[%c48, %c0_40] : memref<64x32xf32, #tpu.memory_space<vmem>>, vector<8x32xf32>
    tpu.vector_store %arg16[%c48, %c0_40], %178 {strides = array<i32>} : memref<64x32xf32, #tpu.memory_space<vmem>>, vector<8x32xf32>,
    %180 = vector.extract_strided_slice %20 {offsets = [7, 0, 0], sizes = [1, 8, 128], strides = [1, 1, 1]} : vector<8x8x128xf32> to vector<1x8x128xf32>
    %181 = vector.shape_cast %180 : vector<1x8x128xf32> to vector<8x128xf32>
    %182 = arith.truncf %178 : vector<8x32xf32> to vector<8x32xbf16>
    %cst_41 = arith.constant dense<0.000000e+00> : vector<8x128xf32>
    %183 = tpu.matmul %182, %21, %cst_41 {dimension_numbers = #tpu.dot_dimension_numbers<[1], [0], [0], [1], [0, 0, 1, 1], [], []>} : vector<8x32xbf16>, vector<32x128xbf16>, vector<8x128xf32> -> vector<8x128xf32>
    %184 = arith.addf %181, %183 : vector<8x128xf32>
    %185 = math.tanh %184 : vector<8x128xf32>
    %186 = arith.negf %184 : vector<8x128xf32>
    %187 = math.exp %186 : vector<8x128xf32>
    %cst_42 = arith.constant 1.000000e+00 : f32
    %188 = vector.broadcast %cst_42 : f32 to vector<8x128xf32>
    %189 = arith.addf %188, %187 : vector<8x128xf32>
    %190 = arith.divf %188, %189 : vector<8x128xf32>
    %191 = arith.select %13, %185, %190 : vector<8x128xi1>, vector<8x128xf32>
    %192 = vector.extract_strided_slice %191 {offsets = [0, 0], sizes = [8, 32], strides = [1, 1]} : vector<8x128xf32> to vector<8x32xf32>
    %193 = vector.extract_strided_slice %191 {offsets = [0, 32], sizes = [8, 32], strides = [1, 1]} : vector<8x128xf32> to vector<8x32xf32>
    %194 = vector.extract_strided_slice %191 {offsets = [0, 64], sizes = [8, 32], strides = [1, 1]} : vector<8x128xf32> to vector<8x32xf32>
    %195 = vector.extract_strided_slice %191 {offsets = [0, 96], sizes = [8, 32], strides = [1, 1]} : vector<8x128xf32> to vector<8x32xf32>
    %196 = arith.mulf %193, %176 : vector<8x32xf32>
    %197 = arith.mulf %192, %194 : vector<8x32xf32>
    %198 = arith.addf %196, %197 : vector<8x32xf32>
    %199 = math.tanh %198 : vector<8x32xf32>
    %200 = arith.mulf %195, %199 : vector<8x32xf32>
    %c56 = arith.constant 56 : index
    %c0_43 = arith.constant 0 : index
    %201 = vector.load %arg16[%c56, %c0_43] : memref<64x32xf32, #tpu.memory_space<vmem>>, vector<8x32xf32>
    tpu.vector_store %arg16[%c56, %c0_43], %200 {strides = array<i32>} : memref<64x32xf32, #tpu.memory_space<vmem>>, vector<8x32xf32>,
    %c0_44 = arith.constant 0 : index
    %c0_45 = arith.constant 0 : index
    %c0_46 = arith.constant 0 : index
    %202 = vector.load %arg14[%c0_44, %c0_45, %c0_46] : memref<2x8x32xf32, #tpu.memory_space<vmem>>, vector<1x8x32xf32>
    %203 = vector.shape_cast %202 : vector<1x8x32xf32> to vector<8x32xf32>
    %204 = vector.shape_cast %200 : vector<8x32xf32> to vector<1x8x32xf32>
    tpu.vector_store %arg14[%c0_44, %c0_45, %c0_46], %204 {strides = array<i32>} : memref<2x8x32xf32, #tpu.memory_space<vmem>>, vector<1x8x32xf32>,
    %c0_47 = arith.constant 0 : index
    %c0_48 = arith.constant 0 : index
    %c0_49 = arith.constant 0 : index
    %205 = vector.load %arg15[%c0_47, %c0_48, %c0_49] : memref<2x8x32xf32, #tpu.memory_space<vmem>>, vector<1x8x32xf32>
    %206 = vector.shape_cast %205 : vector<1x8x32xf32> to vector<8x32xf32>
    %207 = vector.shape_cast %198 : vector<8x32xf32> to vector<1x8x32xf32>
    tpu.vector_store %arg15[%c0_47, %c0_48, %c0_49], %207 {strides = array<i32>} : memref<2x8x32xf32, #tpu.memory_space<vmem>>, vector<1x8x32xf32>,
    %c0_50 = arith.constant 0 : index
    %c0_51 = arith.constant 0 : index
    %208 = vector.load %arg16[%c0_50, %c0_51] : memref<64x32xf32, #tpu.memory_space<vmem>>, vector<64x32xf32>
    %209 = arith.truncf %208 : vector<64x32xf32> to vector<64x32xbf16>
    %c0_52 = arith.constant 0 : index
    %c0_53 = arith.constant 0 : index
    %210 = vector.load %arg6[%c0_52, %c0_53] : memref<32x128xbf16, #tpu.memory_space<vmem>>, vector<32x128xbf16>
    %cst_54 = arith.constant dense<0.000000e+00> : vector<64x128xf32>
    %211 = tpu.matmul %209, %210, %cst_54 {dimension_numbers = #tpu.dot_dimension_numbers<[1], [0], [0], [1], [0, 0, 1, 1], [], []>} : vector<64x32xbf16>, vector<32x128xbf16>, vector<64x128xf32> -> vector<64x128xf32>
    %c0_55 = arith.constant 0 : index
    %c0_56 = arith.constant 0 : index
    %212 = vector.load %arg8[%c0_55, %c0_56] : memref<1x128xf32, #tpu.memory_space<vmem>>, vector<1x128xf32>
    %213 = vector.broadcast %212 : vector<1x128xf32> to vector<64x128xf32>
    %214 = arith.addf %211, %213 : vector<64x128xf32>
    %215 = vector.shape_cast %214 : vector<64x128xf32> to vector<8x8x128xf32>
    %c0_57 = arith.constant 0 : index
    %c0_58 = arith.constant 0 : index
    %216 = vector.load %arg7[%c0_57, %c0_58] : memref<32x128xbf16, #tpu.memory_space<vmem>>, vector<32x128xbf16>
    %c1 = arith.constant 1 : index
    %c0_59 = arith.constant 0 : index
    %c0_60 = arith.constant 0 : index
    %217 = vector.load %arg11[%c1, %c0_59, %c0_60] : memref<2x8x32xf32, #tpu.memory_space<vmem>>, vector<1x8x32xf32>
    %218 = vector.shape_cast %217 : vector<1x8x32xf32> to vector<8x32xf32>
    %c1_61 = arith.constant 1 : index
    %c0_62 = arith.constant 0 : index
    %c0_63 = arith.constant 0 : index
    %219 = vector.load %arg12[%c1_61, %c0_62, %c0_63] : memref<2x8x32xf32, #tpu.memory_space<vmem>>, vector<1x8x32xf32>
    %220 = vector.shape_cast %219 : vector<1x8x32xf32> to vector<8x32xf32>
    %221 = vector.extract_strided_slice %215 {offsets = [0, 0, 0], sizes = [1, 8, 128], strides = [1, 1, 1]} : vector<8x8x128xf32> to vector<1x8x128xf32>
    %222 = vector.shape_cast %221 : vector<1x8x128xf32> to vector<8x128xf32>
    %223 = arith.truncf %218 : vector<8x32xf32> to vector<8x32xbf16>
    %cst_64 = arith.constant dense<0.000000e+00> : vector<8x128xf32>
    %224 = tpu.matmul %223, %216, %cst_64 {dimension_numbers = #tpu.dot_dimension_numbers<[1], [0], [0], [1], [0, 0, 1, 1], [], []>} : vector<8x32xbf16>, vector<32x128xbf16>, vector<8x128xf32> -> vector<8x128xf32>
    %225 = arith.addf %222, %224 : vector<8x128xf32>
    %226 = math.tanh %225 : vector<8x128xf32>
    %227 = arith.negf %225 : vector<8x128xf32>
    %228 = math.exp %227 : vector<8x128xf32>
    %cst_65 = arith.constant 1.000000e+00 : f32
    %229 = vector.broadcast %cst_65 : f32 to vector<8x128xf32>
    %230 = arith.addf %229, %228 : vector<8x128xf32>
    %231 = arith.divf %229, %230 : vector<8x128xf32>
    %232 = arith.select %13, %226, %231 : vector<8x128xi1>, vector<8x128xf32>
    %233 = vector.extract_strided_slice %232 {offsets = [0, 0], sizes = [8, 32], strides = [1, 1]} : vector<8x128xf32> to vector<8x32xf32>
    %234 = vector.extract_strided_slice %232 {offsets = [0, 32], sizes = [8, 32], strides = [1, 1]} : vector<8x128xf32> to vector<8x32xf32>
    %235 = vector.extract_strided_slice %232 {offsets = [0, 64], sizes = [8, 32], strides = [1, 1]} : vector<8x128xf32> to vector<8x32xf32>
    %236 = vector.extract_strided_slice %232 {offsets = [0, 96], sizes = [8, 32], strides = [1, 1]} : vector<8x128xf32> to vector<8x32xf32>
    %237 = arith.mulf %234, %220 : vector<8x32xf32>
    %238 = arith.mulf %233, %235 : vector<8x32xf32>
    %239 = arith.addf %237, %238 : vector<8x32xf32>
    %240 = math.tanh %239 : vector<8x32xf32>
    %241 = arith.mulf %236, %240 : vector<8x32xf32>
    %242 = vector.extract_strided_slice %215 {offsets = [1, 0, 0], sizes = [1, 8, 128], strides = [1, 1, 1]} : vector<8x8x128xf32> to vector<1x8x128xf32>
    %243 = vector.shape_cast %242 : vector<1x8x128xf32> to vector<8x128xf32>
    %244 = arith.truncf %241 : vector<8x32xf32> to vector<8x32xbf16>
    %cst_66 = arith.constant dense<0.000000e+00> : vector<8x128xf32>
    %245 = tpu.matmul %244, %216, %cst_66 {dimension_numbers = #tpu.dot_dimension_numbers<[1], [0], [0], [1], [0, 0, 1, 1], [], []>} : vector<8x32xbf16>, vector<32x128xbf16>, vector<8x128xf32> -> vector<8x128xf32>
    %246 = arith.addf %243, %245 : vector<8x128xf32>
    %247 = math.tanh %246 : vector<8x128xf32>
    %248 = arith.negf %246 : vector<8x128xf32>
    %249 = math.exp %248 : vector<8x128xf32>
    %cst_67 = arith.constant 1.000000e+00 : f32
    %250 = vector.broadcast %cst_67 : f32 to vector<8x128xf32>
    %251 = arith.addf %250, %249 : vector<8x128xf32>
    %252 = arith.divf %250, %251 : vector<8x128xf32>
    %253 = arith.select %13, %247, %252 : vector<8x128xi1>, vector<8x128xf32>
    %254 = vector.extract_strided_slice %253 {offsets = [0, 0], sizes = [8, 32], strides = [1, 1]} : vector<8x128xf32> to vector<8x32xf32>
    %255 = vector.extract_strided_slice %253 {offsets = [0, 32], sizes = [8, 32], strides = [1, 1]} : vector<8x128xf32> to vector<8x32xf32>
    %256 = vector.extract_strided_slice %253 {offsets = [0, 64], sizes = [8, 32], strides = [1, 1]} : vector<8x128xf32> to vector<8x32xf32>
    %257 = vector.extract_strided_slice %253 {offsets = [0, 96], sizes = [8, 32], strides = [1, 1]} : vector<8x128xf32> to vector<8x32xf32>
    %258 = arith.mulf %255, %239 : vector<8x32xf32>
    %259 = arith.mulf %254, %256 : vector<8x32xf32>
    %260 = arith.addf %258, %259 : vector<8x32xf32>
    %261 = math.tanh %260 : vector<8x32xf32>
    %262 = arith.mulf %257, %261 : vector<8x32xf32>
    %263 = vector.extract_strided_slice %215 {offsets = [2, 0, 0], sizes = [1, 8, 128], strides = [1, 1, 1]} : vector<8x8x128xf32> to vector<1x8x128xf32>
    %264 = vector.shape_cast %263 : vector<1x8x128xf32> to vector<8x128xf32>
    %265 = arith.truncf %262 : vector<8x32xf32> to vector<8x32xbf16>
    %cst_68 = arith.constant dense<0.000000e+00> : vector<8x128xf32>
    %266 = tpu.matmul %265, %216, %cst_68 {dimension_numbers = #tpu.dot_dimension_numbers<[1], [0], [0], [1], [0, 0, 1, 1], [], []>} : vector<8x32xbf16>, vector<32x128xbf16>, vector<8x128xf32> -> vector<8x128xf32>
    %267 = arith.addf %264, %266 : vector<8x128xf32>
    %268 = math.tanh %267 : vector<8x128xf32>
    %269 = arith.negf %267 : vector<8x128xf32>
    %270 = math.exp %269 : vector<8x128xf32>
    %cst_69 = arith.constant 1.000000e+00 : f32
    %271 = vector.broadcast %cst_69 : f32 to vector<8x128xf32>
    %272 = arith.addf %271, %270 : vector<8x128xf32>
    %273 = arith.divf %271, %272 : vector<8x128xf32>
    %274 = arith.select %13, %268, %273 : vector<8x128xi1>, vector<8x128xf32>
    %275 = vector.extract_strided_slice %274 {offsets = [0, 0], sizes = [8, 32], strides = [1, 1]} : vector<8x128xf32> to vector<8x32xf32>
    %276 = vector.extract_strided_slice %274 {offsets = [0, 32], sizes = [8, 32], strides = [1, 1]} : vector<8x128xf32> to vector<8x32xf32>
    %277 = vector.extract_strided_slice %274 {offsets = [0, 64], sizes = [8, 32], strides = [1, 1]} : vector<8x128xf32> to vector<8x32xf32>
    %278 = vector.extract_strided_slice %274 {offsets = [0, 96], sizes = [8, 32], strides = [1, 1]} : vector<8x128xf32> to vector<8x32xf32>
    %279 = arith.mulf %276, %260 : vector<8x32xf32>
    %280 = arith.mulf %275, %277 : vector<8x32xf32>
    %281 = arith.addf %279, %280 : vector<8x32xf32>
    %282 = math.tanh %281 : vector<8x32xf32>
    %283 = arith.mulf %278, %282 : vector<8x32xf32>
    %284 = vector.extract_strided_slice %215 {offsets = [3, 0, 0], sizes = [1, 8, 128], strides = [1, 1, 1]} : vector<8x8x128xf32> to vector<1x8x128xf32>
    %285 = vector.shape_cast %284 : vector<1x8x128xf32> to vector<8x128xf32>
    %286 = arith.truncf %283 : vector<8x32xf32> to vector<8x32xbf16>
    %cst_70 = arith.constant dense<0.000000e+00> : vector<8x128xf32>
    %287 = tpu.matmul %286, %216, %cst_70 {dimension_numbers = #tpu.dot_dimension_numbers<[1], [0], [0], [1], [0, 0, 1, 1], [], []>} : vector<8x32xbf16>, vector<32x128xbf16>, vector<8x128xf32> -> vector<8x128xf32>
    %288 = arith.addf %285, %287 : vector<8x128xf32>
    %289 = math.tanh %288 : vector<8x128xf32>
    %290 = arith.negf %288 : vector<8x128xf32>
    %291 = math.exp %290 : vector<8x128xf32>
    %cst_71 = arith.constant 1.000000e+00 : f32
    %292 = vector.broadcast %cst_71 : f32 to vector<8x128xf32>
    %293 = arith.addf %292, %291 : vector<8x128xf32>
    %294 = arith.divf %292, %293 : vector<8x128xf32>
    %295 = arith.select %13, %289, %294 : vector<8x128xi1>, vector<8x128xf32>
    %296 = vector.extract_strided_slice %295 {offsets = [0, 0], sizes = [8, 32], strides = [1, 1]} : vector<8x128xf32> to vector<8x32xf32>
    %297 = vector.extract_strided_slice %295 {offsets = [0, 32], sizes = [8, 32], strides = [1, 1]} : vector<8x128xf32> to vector<8x32xf32>
    %298 = vector.extract_strided_slice %295 {offsets = [0, 64], sizes = [8, 32], strides = [1, 1]} : vector<8x128xf32> to vector<8x32xf32>
    %299 = vector.extract_strided_slice %295 {offsets = [0, 96], sizes = [8, 32], strides = [1, 1]} : vector<8x128xf32> to vector<8x32xf32>
    %300 = arith.mulf %297, %281 : vector<8x32xf32>
    %301 = arith.mulf %296, %298 : vector<8x32xf32>
    %302 = arith.addf %300, %301 : vector<8x32xf32>
    %303 = math.tanh %302 : vector<8x32xf32>
    %304 = arith.mulf %299, %303 : vector<8x32xf32>
    %305 = vector.extract_strided_slice %215 {offsets = [4, 0, 0], sizes = [1, 8, 128], strides = [1, 1, 1]} : vector<8x8x128xf32> to vector<1x8x128xf32>
    %306 = vector.shape_cast %305 : vector<1x8x128xf32> to vector<8x128xf32>
    %307 = arith.truncf %304 : vector<8x32xf32> to vector<8x32xbf16>
    %cst_72 = arith.constant dense<0.000000e+00> : vector<8x128xf32>
    %308 = tpu.matmul %307, %216, %cst_72 {dimension_numbers = #tpu.dot_dimension_numbers<[1], [0], [0], [1], [0, 0, 1, 1], [], []>} : vector<8x32xbf16>, vector<32x128xbf16>, vector<8x128xf32> -> vector<8x128xf32>
    %309 = arith.addf %306, %308 : vector<8x128xf32>
    %310 = math.tanh %309 : vector<8x128xf32>
    %311 = arith.negf %309 : vector<8x128xf32>
    %312 = math.exp %311 : vector<8x128xf32>
    %cst_73 = arith.constant 1.000000e+00 : f32
    %313 = vector.broadcast %cst_73 : f32 to vector<8x128xf32>
    %314 = arith.addf %313, %312 : vector<8x128xf32>
    %315 = arith.divf %313, %314 : vector<8x128xf32>
    %316 = arith.select %13, %310, %315 : vector<8x128xi1>, vector<8x128xf32>
    %317 = vector.extract_strided_slice %316 {offsets = [0, 0], sizes = [8, 32], strides = [1, 1]} : vector<8x128xf32> to vector<8x32xf32>
    %318 = vector.extract_strided_slice %316 {offsets = [0, 32], sizes = [8, 32], strides = [1, 1]} : vector<8x128xf32> to vector<8x32xf32>
    %319 = vector.extract_strided_slice %316 {offsets = [0, 64], sizes = [8, 32], strides = [1, 1]} : vector<8x128xf32> to vector<8x32xf32>
    %320 = vector.extract_strided_slice %316 {offsets = [0, 96], sizes = [8, 32], strides = [1, 1]} : vector<8x128xf32> to vector<8x32xf32>
    %321 = arith.mulf %318, %302 : vector<8x32xf32>
    %322 = arith.mulf %317, %319 : vector<8x32xf32>
    %323 = arith.addf %321, %322 : vector<8x32xf32>
    %324 = math.tanh %323 : vector<8x32xf32>
    %325 = arith.mulf %320, %324 : vector<8x32xf32>
    %326 = vector.extract_strided_slice %215 {offsets = [5, 0, 0], sizes = [1, 8, 128], strides = [1, 1, 1]} : vector<8x8x128xf32> to vector<1x8x128xf32>
    %327 = vector.shape_cast %326 : vector<1x8x128xf32> to vector<8x128xf32>
    %328 = arith.truncf %325 : vector<8x32xf32> to vector<8x32xbf16>
    %cst_74 = arith.constant dense<0.000000e+00> : vector<8x128xf32>
    %329 = tpu.matmul %328, %216, %cst_74 {dimension_numbers = #tpu.dot_dimension_numbers<[1], [0], [0], [1], [0, 0, 1, 1], [], []>} : vector<8x32xbf16>, vector<32x128xbf16>, vector<8x128xf32> -> vector<8x128xf32>
    %330 = arith.addf %327, %329 : vector<8x128xf32>
    %331 = math.tanh %330 : vector<8x128xf32>
    %332 = arith.negf %330 : vector<8x128xf32>
    %333 = math.exp %332 : vector<8x128xf32>
    %cst_75 = arith.constant 1.000000e+00 : f32
    %334 = vector.broadcast %cst_75 : f32 to vector<8x128xf32>
    %335 = arith.addf %334, %333 : vector<8x128xf32>
    %336 = arith.divf %334, %335 : vector<8x128xf32>
    %337 = arith.select %13, %331, %336 : vector<8x128xi1>, vector<8x128xf32>
    %338 = vector.extract_strided_slice %337 {offsets = [0, 0], sizes = [8, 32], strides = [1, 1]} : vector<8x128xf32> to vector<8x32xf32>
    %339 = vector.extract_strided_slice %337 {offsets = [0, 32], sizes = [8, 32], strides = [1, 1]} : vector<8x128xf32> to vector<8x32xf32>
    %340 = vector.extract_strided_slice %337 {offsets = [0, 64], sizes = [8, 32], strides = [1, 1]} : vector<8x128xf32> to vector<8x32xf32>
    %341 = vector.extract_strided_slice %337 {offsets = [0, 96], sizes = [8, 32], strides = [1, 1]} : vector<8x128xf32> to vector<8x32xf32>
    %342 = arith.mulf %339, %323 : vector<8x32xf32>
    %343 = arith.mulf %338, %340 : vector<8x32xf32>
    %344 = arith.addf %342, %343 : vector<8x32xf32>
    %345 = math.tanh %344 : vector<8x32xf32>
    %346 = arith.mulf %341, %345 : vector<8x32xf32>
    %347 = vector.extract_strided_slice %215 {offsets = [6, 0, 0], sizes = [1, 8, 128], strides = [1, 1, 1]} : vector<8x8x128xf32> to vector<1x8x128xf32>
    %348 = vector.shape_cast %347 : vector<1x8x128xf32> to vector<8x128xf32>
    %349 = arith.truncf %346 : vector<8x32xf32> to vector<8x32xbf16>
    %cst_76 = arith.constant dense<0.000000e+00> : vector<8x128xf32>
    %350 = tpu.matmul %349, %216, %cst_76 {dimension_numbers = #tpu.dot_dimension_numbers<[1], [0], [0], [1], [0, 0, 1, 1], [], []>} : vector<8x32xbf16>, vector<32x128xbf16>, vector<8x128xf32> -> vector<8x128xf32>
    %351 = arith.addf %348, %350 : vector<8x128xf32>
    %352 = math.tanh %351 : vector<8x128xf32>
    %353 = arith.negf %351 : vector<8x128xf32>
    %354 = math.exp %353 : vector<8x128xf32>
    %cst_77 = arith.constant 1.000000e+00 : f32
    %355 = vector.broadcast %cst_77 : f32 to vector<8x128xf32>
    %356 = arith.addf %355, %354 : vector<8x128xf32>
    %357 = arith.divf %355, %356 : vector<8x128xf32>
    %358 = arith.select %13, %352, %357 : vector<8x128xi1>, vector<8x128xf32>
    %359 = vector.extract_strided_slice %358 {offsets = [0, 0], sizes = [8, 32], strides = [1, 1]} : vector<8x128xf32> to vector<8x32xf32>
    %360 = vector.extract_strided_slice %358 {offsets = [0, 32], sizes = [8, 32], strides = [1, 1]} : vector<8x128xf32> to vector<8x32xf32>
    %361 = vector.extract_strided_slice %358 {offsets = [0, 64], sizes = [8, 32], strides = [1, 1]} : vector<8x128xf32> to vector<8x32xf32>
    %362 = vector.extract_strided_slice %358 {offsets = [0, 96], sizes = [8, 32], strides = [1, 1]} : vector<8x128xf32> to vector<8x32xf32>
    %363 = arith.mulf %360, %344 : vector<8x32xf32>
    %364 = arith.mulf %359, %361 : vector<8x32xf32>
    %365 = arith.addf %363, %364 : vector<8x32xf32>
    %366 = math.tanh %365 : vector<8x32xf32>
    %367 = arith.mulf %362, %366 : vector<8x32xf32>
    %368 = vector.extract_strided_slice %215 {offsets = [7, 0, 0], sizes = [1, 8, 128], strides = [1, 1, 1]} : vector<8x8x128xf32> to vector<1x8x128xf32>
    %369 = vector.shape_cast %368 : vector<1x8x128xf32> to vector<8x128xf32>
    %370 = arith.truncf %367 : vector<8x32xf32> to vector<8x32xbf16>
    %cst_78 = arith.constant dense<0.000000e+00> : vector<8x128xf32>
    %371 = tpu.matmul %370, %216, %cst_78 {dimension_numbers = #tpu.dot_dimension_numbers<[1], [0], [0], [1], [0, 0, 1, 1], [], []>} : vector<8x32xbf16>, vector<32x128xbf16>, vector<8x128xf32> -> vector<8x128xf32>
    %372 = arith.addf %369, %371 : vector<8x128xf32>
    %373 = math.tanh %372 : vector<8x128xf32>
    %374 = arith.negf %372 : vector<8x128xf32>
    %375 = math.exp %374 : vector<8x128xf32>
    %cst_79 = arith.constant 1.000000e+00 : f32
    %376 = vector.broadcast %cst_79 : f32 to vector<8x128xf32>
    %377 = arith.addf %376, %375 : vector<8x128xf32>
    %378 = arith.divf %376, %377 : vector<8x128xf32>
    %379 = arith.select %13, %373, %378 : vector<8x128xi1>, vector<8x128xf32>
    %380 = vector.extract_strided_slice %379 {offsets = [0, 0], sizes = [8, 32], strides = [1, 1]} : vector<8x128xf32> to vector<8x32xf32>
    %381 = vector.extract_strided_slice %379 {offsets = [0, 32], sizes = [8, 32], strides = [1, 1]} : vector<8x128xf32> to vector<8x32xf32>
    %382 = vector.extract_strided_slice %379 {offsets = [0, 64], sizes = [8, 32], strides = [1, 1]} : vector<8x128xf32> to vector<8x32xf32>
    %383 = vector.extract_strided_slice %379 {offsets = [0, 96], sizes = [8, 32], strides = [1, 1]} : vector<8x128xf32> to vector<8x32xf32>
    %384 = arith.mulf %381, %365 : vector<8x32xf32>
    %385 = arith.mulf %380, %382 : vector<8x32xf32>
    %386 = arith.addf %384, %385 : vector<8x32xf32>
    %387 = math.tanh %386 : vector<8x32xf32>
    %388 = arith.mulf %383, %387 : vector<8x32xf32>
    %c1_80 = arith.constant 1 : index
    %c0_81 = arith.constant 0 : index
    %c0_82 = arith.constant 0 : index
    %389 = vector.load %arg14[%c1_80, %c0_81, %c0_82] : memref<2x8x32xf32, #tpu.memory_space<vmem>>, vector<1x8x32xf32>
    %390 = vector.shape_cast %389 : vector<1x8x32xf32> to vector<8x32xf32>
    %391 = vector.shape_cast %388 : vector<8x32xf32> to vector<1x8x32xf32>
    tpu.vector_store %arg14[%c1_80, %c0_81, %c0_82], %391 {strides = array<i32>} : memref<2x8x32xf32, #tpu.memory_space<vmem>>, vector<1x8x32xf32>,
    %c1_83 = arith.constant 1 : index
    %c0_84 = arith.constant 0 : index
    %c0_85 = arith.constant 0 : index
    %392 = vector.load %arg15[%c1_83, %c0_84, %c0_85] : memref<2x8x32xf32, #tpu.memory_space<vmem>>, vector<1x8x32xf32>
    %393 = vector.shape_cast %392 : vector<1x8x32xf32> to vector<8x32xf32>
    %394 = vector.shape_cast %386 : vector<8x32xf32> to vector<1x8x32xf32>
    tpu.vector_store %arg15[%c1_83, %c0_84, %c0_85], %394 {strides = array<i32>} : memref<2x8x32xf32, #tpu.memory_space<vmem>>, vector<1x8x32xf32>,
    %395 = arith.truncf %388 : vector<8x32xf32> to vector<8x32xbf16>
    %c0_86 = arith.constant 0 : index
    %c0_87 = arith.constant 0 : index
    %396 = vector.load %arg9[%c0_86, %c0_87] : memref<32x128xbf16, #tpu.memory_space<vmem>>, vector<32x128xbf16>
    %cst_88 = arith.constant dense<0.000000e+00> : vector<8x128xf32>
    %397 = tpu.matmul %395, %396, %cst_88 {dimension_numbers = #tpu.dot_dimension_numbers<[1], [0], [0], [1], [0, 0, 1, 1], [], []>} : vector<8x32xbf16>, vector<32x128xbf16>, vector<8x128xf32> -> vector<8x128xf32>
    %c0_89 = arith.constant 0 : index
    %c0_90 = arith.constant 0 : index
    %398 = vector.load %arg10[%c0_89, %c0_90] : memref<1x128xf32, #tpu.memory_space<vmem>>, vector<1x128xf32>
    %399 = vector.broadcast %398 : vector<1x128xf32> to vector<8x128xf32>
    %400 = arith.addf %397, %399 : vector<8x128xf32>
    %c0_91 = arith.constant 0 : index
    %c0_92 = arith.constant 0 : index
    %401 = vector.load %arg13[%c0_91, %c0_92] : memref<8x128xf32, #tpu.memory_space<vmem>>, vector<8x128xf32>
    tpu.vector_store %arg13[%c0_91, %c0_92], %400 {strides = array<i32>} : memref<8x128xf32, #tpu.memory_space<vmem>>, vector<8x128xf32>,
    return
  }
}

</mosaic_0001>

<llo_original>
// kernel: enhanced_lstm_forward.1
$region0: #{enhanced_lstm_forward.1}
  #allocation0 [shape = 'u32[]', space=smem, size = 0x4, offset = 0x4, fixed_abs, tag = 'smem constant byte address 0x4 - core index']
  #allocation1 [shape = 'u32[144,128]{1,0:T(1,128)}', space=vmem, size = 0x12000, scoped, tag = 'internal scratch']
  #allocation2 [shape = 'f32[64,32]{1,0:T(8,128)}', space=vmem, size = 0x8000, scoped, tag = 'scratch operand']
  %s0 = inlined_call_operand.vmem [shape: bf16[64,4], index: 0, kind: input, shape index: {}]
  %s1 = inlined_call_operand.vmem [shape: bf16[4,16], index: 1, kind: input, shape index: {}]
  %s2 = inlined_call_operand.vmem [shape: f32[1,16], index: 2, kind: input, shape index: {}]
  %s3 = inlined_call_operand.vmem [shape: bf16[16,128], index: 3, kind: input, shape index: {}]
  %s4 = inlined_call_operand.vmem [shape: bf16[32,128], index: 4, kind: input, shape index: {}]
  %s5 = inlined_call_operand.vmem [shape: f32[1,128], index: 5, kind: input, shape index: {}]
  %s6 = inlined_call_operand.vmem [shape: bf16[32,128], index: 6, kind: input, shape index: {}]
  %s7 = inlined_call_operand.vmem [shape: bf16[32,128], index: 7, kind: input, shape index: {}]
  %s8 = inlined_call_operand.vmem [shape: f32[1,128], index: 8, kind: input, shape index: {}]
  %s9 = inlined_call_operand.vmem [shape: bf16[32,128], index: 9, kind: input, shape index: {}]
  %s10 = inlined_call_operand.vmem [shape: f32[1,128], index: 10, kind: input, shape index: {}]
  %s11 = inlined_call_operand.vmem [shape: f32[2,8,32], index: 11, kind: input, shape index: {}]
  %s12 = inlined_call_operand.vmem [shape: f32[2,8,32], index: 12, kind: input, shape index: {}]
  %s13 = inlined_call_operand.vmem [shape: f32[8,128], index: 13, kind: output, shape index: {0}]
  %s14 = inlined_call_operand.vmem [shape: f32[2,8,32], index: 14, kind: output, shape index: {1}]
  %s15 = inlined_call_operand.vmem [shape: f32[2,8,32], index: 15, kind: output, shape index: {2}]
  %16 = xla_tuple %s13, %s14, %s15
  %s17 = sld [smem:[#allocation0]]
  $region78: #{enhanced_lstm_forward.1} parent=0
    _
  %s19 = ssub.s32 1, %s17
  %s20 = scalar_select 0, %s19, %s17
  // Predicated region
  $region2: #{enhanced_lstm_forward.1} parent=0 // pred_check
    _
  $region3: #{enhanced_lstm_forward.1} parent=0 // pred_check_branch
    %22 = sbr.rel (0) target = $region5
  $region4: #{enhanced_lstm_forward.1} parent=0 // pred_region
    _
  $region5: #{enhanced_lstm_forward.1} parent=0 // pred_fallthru
    _
  // Predicated region
  $region6: #{enhanced_lstm_forward.1} parent=0 // pred_check
    _
  $region7: #{enhanced_lstm_forward.1} parent=0 // pred_check_branch
    %24 = sbr.rel (0) target = $region9
  $region8: #{enhanced_lstm_forward.1} parent=0 // pred_region
    _
  $region9: #{enhanced_lstm_forward.1} parent=0 // pred_fallthru
    _
  // Predicated region
  $region10: #{enhanced_lstm_forward.1} parent=0 // pred_check
    _
  $region11: #{enhanced_lstm_forward.1} parent=0 // pred_check_branch
    %26 = sbr.rel (0) target = $region13
  $region12: #{enhanced_lstm_forward.1} parent=0 // pred_region
    _
  $region13: #{enhanced_lstm_forward.1} parent=0 // pred_fallthru
    _
  // Predicated region
  $region14: #{enhanced_lstm_forward.1} parent=0 // pred_check
    _
  $region15: #{enhanced_lstm_forward.1} parent=0 // pred_check_branch
    %28 = sbr.rel (0) target = $region17
  $region16: #{enhanced_lstm_forward.1} parent=0 // pred_region
    _
  $region17: #{enhanced_lstm_forward.1} parent=0 // pred_fallthru
    _
  // Predicated region
  $region18: #{enhanced_lstm_forward.1} parent=0 // pred_check
    _
  $region19: #{enhanced_lstm_forward.1} parent=0 // pred_check_branch
    %30 = sbr.rel (0) target = $region21
  $region20: #{enhanced_lstm_forward.1} parent=0 // pred_region
    _
  $region21: #{enhanced_lstm_forward.1} parent=0 // pred_fallthru
    _
  // Predicated region
  $region22: #{enhanced_lstm_forward.1} parent=0 // pred_check
    _
  $region23: #{enhanced_lstm_forward.1} parent=0 // pred_check_branch
    %32 = sbr.rel (0) target = $region25
  $region24: #{enhanced_lstm_forward.1} parent=0 // pred_region
    _
  $region25: #{enhanced_lstm_forward.1} parent=0 // pred_fallthru
    _
  // Predicated region
  $region26: #{enhanced_lstm_forward.1} parent=0 // pred_check
    _
  $region27: #{enhanced_lstm_forward.1} parent=0 // pred_check_branch
    %34 = sbr.rel (0) target = $region29
  $region28: #{enhanced_lstm_forward.1} parent=0 // pred_region
    _
  $region29: #{enhanced_lstm_forward.1} parent=0 // pred_fallthru
    _
  // Predicated region
  $region30: #{enhanced_lstm_forward.1} parent=0 // pred_check
    _
  $region31: #{enhanced_lstm_forward.1} parent=0 // pred_check_branch
    %36 = sbr.rel (0) target = $region33
  $region32: #{enhanced_lstm_forward.1} parent=0 // pred_region
    _
  $region33: #{enhanced_lstm_forward.1} parent=0 // pred_fallthru
    _
  // Predicated region
  $region34: #{enhanced_lstm_forward.1} parent=0 // pred_check
    _
  $region35: #{enhanced_lstm_forward.1} parent=0 // pred_check_branch
    %38 = sbr.rel (0) target = $region37
  $region36: #{enhanced_lstm_forward.1} parent=0 // pred_region
    _
  $region37: #{enhanced_lstm_forward.1} parent=0 // pred_fallthru
    _
  // Predicated region
  $region38: #{enhanced_lstm_forward.1} parent=0 // pred_check
    _
  $region39: #{enhanced_lstm_forward.1} parent=0 // pred_check_branch
    %40 = sbr.rel (0) target = $region41
  $region40: #{enhanced_lstm_forward.1} parent=0 // pred_region
    _
  $region41: #{enhanced_lstm_forward.1} parent=0 // pred_fallthru
    _
  // Predicated region
  $region42: #{enhanced_lstm_forward.1} parent=0 // pred_check
    _
  $region43: #{enhanced_lstm_forward.1} parent=0 // pred_check_branch
    %42 = sbr.rel (0) target = $region45
  $region44: #{enhanced_lstm_forward.1} parent=0 // pred_region
    _
  $region45: #{enhanced_lstm_forward.1} parent=0 // pred_fallthru
    _
  // Predicated region
  $region46: #{enhanced_lstm_forward.1} parent=0 // pred_check
    _
  $region47: #{enhanced_lstm_forward.1} parent=0 // pred_check_branch
    %44 = sbr.rel (0) target = $region49
  $region48: #{enhanced_lstm_forward.1} parent=0 // pred_region
    _
  $region49: #{enhanced_lstm_forward.1} parent=0 // pred_fallthru
    _
  // Predicated region
  $region50: #{enhanced_lstm_forward.1} parent=0 // pred_check
    _
  $region51: #{enhanced_lstm_forward.1} parent=0 // pred_check_branch
    %46 = sbr.rel (0) target = $region53
  $region52: #{enhanced_lstm_forward.1} parent=0 // pred_region
    _
  $region53: #{enhanced_lstm_forward.1} parent=0 // pred_fallthru
    _
  %v48 = vld [vmem:[%s0] sm:$0xf]
  %v49 = vld [vmem:[%s0 + $0x4] sm:$0xf]
  %v50 = vld [vmem:[%s0 + $0x8] sm:$0xf]
  %v51 = vld [vmem:[%s0 + $0xc] sm:$0xf]
  %v52 = vld [vmem:[%s0 + $0x10] sm:$0xf]
  %v53 = vld [vmem:[%s0 + $0x14] sm:$0xf]
  %v54 = vld [vmem:[%s0 + $0x18] sm:$0xf]
  %v55 = vld [vmem:[%s0 + $0x1c] sm:$0xf]
  %v56 = vld [vmem:[%s1] sm:$0x3]
  %v57 = vld [vmem:[%s2] sm:$0x1]
  %v59 = vlaneseq
  %v60 = vshrl.u32 %v59, 7
  %v61 = vsub.s32 0, %v60
  %v62 = vrot.slane %v57, %v61
  %v72 = vunpack.c.l.b16 %v48
  %v73 = vunpack.c.l.b16 %v49
  %v74 = vunpack.c.l.b16 %v50
  %v75 = vunpack.c.l.b16 %v51
  %v76 = vunpack.c.l.b16 %v52
  %v77 = vunpack.c.l.b16 %v53
  %v78 = vunpack.c.l.b16 %v54
  %v79 = vunpack.c.l.b16 %v55
  %v80 = vpack.c.b16 %v73, %v72
  %v81 = vpack.c.b16 %v75, %v74
  %v82 = vpack.c.b16 %v77, %v76
  %v83 = vpack.c.b16 %v79, %v78
  %vm84 = vcmask 31744
  %v86 = vsel %vm84, %v80, 0
  %v89 = vsel %vm84, %v81, 0
  %v92 = vsel %vm84, %v82, 0
  %v95 = vsel %vm84, %v83, 0
  %vm97 = vcmask 1041408
  %v99 = vsel %vm97, %v56, 0
  %101 = vmatprep.subr.bf16.mxu0 0
  %102 = vmatpush1.bf16.msra.mxu0 %v99
  %103 = vmatprep.subr.bf16.mxu0 0
  %104 = vmatpush1.bf16.msra.mxu0 0
  %105 = vmatprep.subr.bf16.mxu0 0
  %106 = vmatpush1.bf16.msra.mxu0 0
  %107 = vmatprep.subr.bf16.mxu0 0
  %108 = vmatpush1.bf16.msra.mxu0 0
  %109 = vmatprep.subr.bf16.mxu0 0
  %110 = vmatpush1.bf16.msra.mxu0 0
  %111 = vmatprep.subr.bf16.mxu0 0
  %112 = vmatpush1.bf16.msra.mxu0 0
  %113 = vmatprep.subr.bf16.mxu0 0
  %114 = vmatpush1.bf16.msra.mxu0 0
  %115 = vmatprep.subr.bf16.mxu0 0
  %116 = vmatpush1.bf16.msra.mxu0 0
  %117 = vmatprep.subr.bf16.mxu0 0
  %118 = vmatpush1.bf16.msra.mxu0 0
  %119 = vmatprep.subr.bf16.mxu0 0
  %120 = vmatpush1.bf16.msra.mxu0 0
  %121 = vmatprep.subr.bf16.mxu0 0
  %122 = vmatpush1.bf16.msra.mxu0 0
  %123 = vmatprep.subr.bf16.mxu0 0
  %124 = vmatpush1.bf16.msra.mxu0 0
  %125 = vmatprep.subr.bf16.mxu0 0
  %126 = vmatpush1.bf16.msra.mxu0 0
  %127 = vmatprep.subr.bf16.mxu0 0
  %128 = vmatpush1.bf16.msra.mxu0 0
  %129 = vmatprep.subr.bf16.mxu0 0
  %130 = vmatpush1.bf16.msra.mxu0 0
  %131 = vmatprep.subr.bf16.mxu0 0
  %132 = vmatpush1.bf16.msra.mxu0 0
  %133 = vmatprep.mubr.bf16.mxu0 0
  %134 = vmatmul.mubr.bf16.gmra.mrb[0].mxu0 %v86
  %v135 = vpop.f32.mrb[0].mxu0
  %v136 = vadd.f32 %v62, %v135
  %v137 = vpop.f32.mrb[0].mxu0
  %v138 = vpop.f32.mrb[0].mxu0
  %v139 = vadd.f32 %v62, %v138
  %v140 = vpop.f32.mrb[0].mxu0
  %141 = vmatprep.mubr.bf16.mxu0 0
  %142 = vmatmul.mubr.bf16.gmra.mrb[0].mxu0 %v89
  %v143 = vpop.f32.mrb[0].mxu0
  %v144 = vadd.f32 %v62, %v143
  %v145 = vpop.f32.mrb[0].mxu0
  %v146 = vpop.f32.mrb[0].mxu0
  %v147 = vadd.f32 %v62, %v146
  %v148 = vpop.f32.mrb[0].mxu0
  %149 = vmatprep.mubr.bf16.mxu0 0
  %150 = vmatmul.mubr.bf16.gmra.mrb[0].mxu0 %v92
  %v151 = vpop.f32.mrb[0].mxu0
  %v152 = vadd.f32 %v62, %v151
  %v153 = vpop.f32.mrb[0].mxu0
  %v154 = vpop.f32.mrb[0].mxu0
  %v155 = vadd.f32 %v62, %v154
  %v156 = vpop.f32.mrb[0].mxu0
  %157 = vmatprep.mubr.bf16.mxu0 0
  %158 = vmatmul.mubr.bf16.gmra.mrb[0].mxu0 %v95
  %v159 = vpop.f32.mrb[0].mxu0
  %v160 = vadd.f32 %v62, %v159
  %v161 = vpop.f32.mrb[0].mxu0
  %v162 = vpop.f32.mrb[0].mxu0
  %v163 = vadd.f32 %v62, %v162
  %v164 = vpop.f32.mrb[0].mxu0
  %165 = vdwg.mxu0
  %v166 = vmax.f32 %v136, 0.0
  %v167 = vmax.f32 %v139, 0.0
  %v168 = vmax.f32 %v144, 0.0
  %v169 = vmax.f32 %v147, 0.0
  %v170 = vmax.f32 %v152, 0.0
  %v171 = vmax.f32 %v155, 0.0
  %v172 = vmax.f32 %v160, 0.0
  %v173 = vmax.f32 %v163, 0.0
  %v174 = vlaneseq
  %v175 = vand.u32 %v174, 127
  %vm176 = vcmp.ge.s32.totalorder %v175, 64
  %vm177 = vcmp.lt.s32.totalorder %v175, 96
  %vm178 = vmand %vm176, %vm177
  %v179 = vpack.c.bf16 %v167, %v166
  %v180 = vpack.c.bf16 %v169, %v168
  %v181 = vpack.c.bf16 %v171, %v170
  %v182 = vpack.c.bf16 %v173, %v172
  %v183 = vld [vmem:[%s3] sm:$0xf]
  %v184 = vld [vmem:[%s3 + $0x4] sm:$0xf]
  %v185 = vld [vmem:[%s5] sm:$0x1]
  %v187 = vlaneseq
  %v188 = vshrl.u32 %v187, 7
  %v189 = vsub.s32 0, %v188
  %v190 = vrot.slane %v185, %v189
  %v194 = vunpack.c.l.b16 %v183
  %v195 = vunpack.c.l.b16 %v184
  %v196 = vpack.c.b16 %v195, %v194
  %vm198 = vcmask 130048
  %v200 = vsel %vm198, %v179, 0
  %v203 = vsel %vm198, %v180, 0
  %v206 = vsel %vm198, %v181, 0
  %v209 = vsel %vm198, %v182, 0
  %211 = vmatprep.subr.bf16.mxu0 0
  %212 = vmatpush1.bf16.msra.mxu0 %v196
  %213 = vmatprep.subr.bf16.mxu0 0
  %214 = vmatpush1.bf16.msra.mxu0 0
  %215 = vmatprep.subr.bf16.mxu0 0
  %216 = vmatpush1.bf16.msra.mxu0 0
  %217 = vmatprep.subr.bf16.mxu0 0
  %218 = vmatpush1.bf16.msra.mxu0 0
  %219 = vmatprep.subr.bf16.mxu0 0
  %220 = vmatpush1.bf16.msra.mxu0 0
  %221 = vmatprep.subr.bf16.mxu0 0
  %222 = vmatpush1.bf16.msra.mxu0 0
  %223 = vmatprep.subr.bf16.mxu0 0
  %224 = vmatpush1.bf16.msra.mxu0 0
  %225 = vmatprep.subr.bf16.mxu0 0
  %226 = vmatpush1.bf16.msra.mxu0 0
  %227 = vmatprep.subr.bf16.mxu0 0
  %228 = vmatpush1.bf16.msra.mxu0 0
  %229 = vmatprep.subr.bf16.mxu0 0
  %230 = vmatpush1.bf16.msra.mxu0 0
  %231 = vmatprep.subr.bf16.mxu0 0
  %232 = vmatpush1.bf16.msra.mxu0 0
  %233 = vmatprep.subr.bf16.mxu0 0
  %234 = vmatpush1.bf16.msra.mxu0 0
  %235 = vmatprep.subr.bf16.mxu0 0
  %236 = vmatpush1.bf16.msra.mxu0 0
  %237 = vmatprep.subr.bf16.mxu0 0
  %238 = vmatpush1.bf16.msra.mxu0 0
  %239 = vmatprep.subr.bf16.mxu0 0
  %240 = vmatpush1.bf16.msra.mxu0 0
  %241 = vmatprep.subr.bf16.mxu0 0
  %242 = vmatpush1.bf16.msra.mxu0 0
  %243 = vmatprep.mubr.bf16.mxu0 0
  %244 = vmatmul.mubr.bf16.gmra.mrb[0].mxu0 %v200
  %v245 = vpop.f32.mrb[0].mxu0
  %v246 = vadd.f32 %v190, %v245
  %v247 = vpop.f32.mrb[0].mxu0
  %v248 = vpop.f32.mrb[0].mxu0
  %v249 = vadd.f32 %v190, %v248
  %v250 = vpop.f32.mrb[0].mxu0
  %251 = vmatprep.mubr.bf16.mxu0 0
  %252 = vmatmul.mubr.bf16.gmra.mrb[0].mxu0 %v203
  %v253 = vpop.f32.mrb[0].mxu0
  %v254 = vadd.f32 %v190, %v253
  %v255 = vpop.f32.mrb[0].mxu0
  %v256 = vpop.f32.mrb[0].mxu0
  %v257 = vadd.f32 %v190, %v256
  %v258 = vpop.f32.mrb[0].mxu0
  %259 = vmatprep.mubr.bf16.mxu0 0
  %260 = vmatmul.mubr.bf16.gmra.mrb[0].mxu0 %v206
  %v261 = vpop.f32.mrb[0].mxu0
  %v262 = vadd.f32 %v190, %v261
  %v263 = vpop.f32.mrb[0].mxu0
  %v264 = vpop.f32.mrb[0].mxu0
  %v265 = vadd.f32 %v190, %v264
  %v266 = vpop.f32.mrb[0].mxu0
  %267 = vmatprep.mubr.bf16.mxu0 0
  %268 = vmatmul.mubr.bf16.gmra.mrb[0].mxu0 %v209
  %v269 = vpop.f32.mrb[0].mxu0
  %v270 = vadd.f32 %v190, %v269
  %v271 = vpop.f32.mrb[0].mxu0
  %v272 = vpop.f32.mrb[0].mxu0
  %v273 = vadd.f32 %v190, %v272
  %v274 = vpop.f32.mrb[0].mxu0
  %275 = vdwg.mxu0
  %v276 = vld [vmem:[%s4] sm:$0xf]
  %v277 = vld [vmem:[%s4 + $0x4] sm:$0xf]
  %v278 = vld [vmem:[%s4 + $0x8] sm:$0xf]
  %v279 = vld [vmem:[%s4 + $0xc] sm:$0xf]
  %v280 = vld [vmem:[%s11] sm:$0xff]
  %v281 = vld [vmem:[%s12] sm:$0xff]
  %v282 = vpack.c.bf16 %v280, %v280
  %v287 = vunpack.c.l.b16 %v276
  %v288 = vunpack.c.l.b16 %v277
  %v289 = vunpack.c.l.b16 %v278
  %v290 = vunpack.c.l.b16 %v279
  %v291 = vpack.c.b16 %v288, %v287
  %v292 = vpack.c.b16 %v290, %v289
  %vm295 = vcmask 261120
  %v297 = vsel %vm295, %v282, 0
  %299 = vmatprep.subr.bf16.mxu0 0
  %300 = vmatpush1.bf16.msra.mxu0 %v291
  %301 = vmatprep.subr.bf16.mxu0 0
  %302 = vmatpush1.bf16.msra.mxu0 %v292
  %303 = vmatprep.subr.bf16.mxu0 0
  %304 = vmatpush1.bf16.msra.mxu0 0
  %305 = vmatprep.subr.bf16.mxu0 0
  %306 = vmatpush1.bf16.msra.mxu0 0
  %307 = vmatprep.subr.bf16.mxu0 0
  %308 = vmatpush1.bf16.msra.mxu0 0
  %309 = vmatprep.subr.bf16.mxu0 0
  %310 = vmatpush1.bf16.msra.mxu0 0
  %311 = vmatprep.subr.bf16.mxu0 0
  %312 = vmatpush1.bf16.msra.mxu0 0
  %313 = vmatprep.subr.bf16.mxu0 0
  %314 = vmatpush1.bf16.msra.mxu0 0
  %315 = vmatprep.subr.bf16.mxu0 0
  %316 = vmatpush1.bf16.msra.mxu0 0
  %317 = vmatprep.subr.bf16.mxu0 0
  %318 = vmatpush1.bf16.msra.mxu0 0
  %319 = vmatprep.subr.bf16.mxu0 0
  %320 = vmatpush1.bf16.msra.mxu0 0
  %321 = vmatprep.subr.bf16.mxu0 0
  %322 = vmatpush1.bf16.msra.mxu0 0
  %323 = vmatprep.subr.bf16.mxu0 0
  %324 = vmatpush1.bf16.msra.mxu0 0
  %325 = vmatprep.subr.bf16.mxu0 0
  %326 = vmatpush1.bf16.msra.mxu0 0
  %327 = vmatprep.subr.bf16.mxu0 0
  %328 = vmatpush1.bf16.msra.mxu0 0
  %329 = vmatprep.subr.bf16.mxu0 0
  %330 = vmatpush1.bf16.msra.mxu0 0
  %331 = vmatprep.mubr.bf16.mxu0 0
  %332 = vmatmul.mubr.bf16.gmra.mrb[0].mxu0 %v297
  %v333 = vpop.f32.mrb[0].mxu0
  %v334 = vadd.f32 0.0, %v333
  %v335 = vpop.f32.mrb[0].mxu0
  %v336 = vpop.f32.mrb[0].mxu0
  %v337 = vpop.f32.mrb[0].mxu0
  %338 = vdwg.mxu0
  %v339 = vadd.f32 %v246, %v334
  %v340 = vtanh.pop %v339
  %v341 = vxor.u32 %v339, 2147483648
  %v342 = vmul.f32 %v341, 1.442695
  %v343 = vpow.pop %v342
  %v344 = vadd.f32 %v343, 1.0
  %v345 = vrcp.pop %v344
  %v346 = vmul.f32 1.0, %v345
  %v347 = vsel %vm178, %v340, %v346
  %349 = vrot.lane.b32.xlu0 %v281, 32
  %v350 = vpop.permute.xlu0 %349
  %v352 = vmul.f32 %v347, %v350
  %354 = vrot.lane.b32.xlu0 %v347, 64
  %v355 = vpop.permute.xlu0 %354
  %v357 = vmul.f32 %v347, %v355
  %359 = vrot.lane.b32.xlu0 %v357, 32
  %v360 = vpop.permute.xlu0 %359
  %v362 = vadd.f32 %v352, %v360
  %v363 = vtanh.pop %v362
  %365 = vrot.lane.b32.xlu0 %v363, 64
  %v366 = vpop.permute.xlu0 %365
  %v368 = vmul.f32 %v347, %v366
  %370 = vrot.lane.b32.xlu0 %v368, 32
  %v371 = vpop.permute.xlu0 %370
  %373 = vst.msk [vmem:[#allocation2] sm:$0xff] %vm295, %v371
  %v374 = vpack.c.bf16 %v368, %v368
  %376 = vrot.lane.b32.xlu0 %v374, 32
  %v377 = vpop.permute.xlu0 %376
  %v379 = vsel %vm295, %v377, 0
  %381 = vmatprep.subr.bf16.mxu0 0
  %382 = vmatpush1.bf16.msra.mxu0 %v291
  %383 = vmatprep.subr.bf16.mxu0 0
  %384 = vmatpush1.bf16.msra.mxu0 %v292
  %385 = vmatprep.subr.bf16.mxu0 0
  %386 = vmatpush1.bf16.msra.mxu0 0
  %387 = vmatprep.subr.bf16.mxu0 0
  %388 = vmatpush1.bf16.msra.mxu0 0
  %389 = vmatprep.subr.bf16.mxu0 0
  %390 = vmatpush1.bf16.msra.mxu0 0
  %391 = vmatprep.subr.bf16.mxu0 0
  %392 = vmatpush1.bf16.msra.mxu0 0
  %393 = vmatprep.subr.bf16.mxu0 0
  %394 = vmatpush1.bf16.msra.mxu0 0
  %395 = vmatprep.subr.bf16.mxu0 0
  %396 = vmatpush1.bf16.msra.mxu0 0
  %397 = vmatprep.subr.bf16.mxu0 0
  %398 = vmatpush1.bf16.msra.mxu0 0
  %399 = vmatprep.subr.bf16.mxu0 0
  %400 = vmatpush1.bf16.msra.mxu0 0
  %401 = vmatprep.subr.bf16.mxu0 0
  %402 = vmatpush1.bf16.msra.mxu0 0
  %403 = vmatprep.subr.bf16.mxu0 0
  %404 = vmatpush1.bf16.msra.mxu0 0
  %405 = vmatprep.subr.bf16.mxu0 0
  %406 = vmatpush1.bf16.msra.mxu0 0
  %407 = vmatprep.subr.bf16.mxu0 0
  %408 = vmatpush1.bf16.msra.mxu0 0
  %409 = vmatprep.subr.bf16.mxu0 0
  %410 = vmatpush1.bf16.msra.mxu0 0
  %411 = vmatprep.subr.bf16.mxu0 0
  %412 = vmatpush1.bf16.msra.mxu0 0
  %413 = vmatprep.mubr.bf16.mxu0 0
  %414 = vmatmul.mubr.bf16.gmra.mrb[0].mxu0 %v379
  %v415 = vpop.f32.mrb[0].mxu0
  %v416 = vadd.f32 0.0, %v415
  %v417 = vpop.f32.mrb[0].mxu0
  %v418 = vpop.f32.mrb[0].mxu0
  %v419 = vpop.f32.mrb[0].mxu0
  %420 = vdwg.mxu0
  %v421 = vadd.f32 %v249, %v416
  %v422 = vtanh.pop %v421
  %v423 = vxor.u32 %v421, 2147483648
  %v424 = vmul.f32 %v423, 1.442695
  %v425 = vpow.pop %v424
  %v426 = vadd.f32 %v425, 1.0
  %v427 = vrcp.pop %v426
  %v428 = vmul.f32 1.0, %v427
  %v429 = vsel %vm178, %v422, %v428
  %v430 = vmul.f32 %v429, %v362
  %432 = vrot.lane.b32.xlu0 %v429, 64
  %v433 = vpop.permute.xlu0 %432
  %v435 = vmul.f32 %v429, %v433
  %437 = vrot.lane.b32.xlu0 %v435, 32
  %v438 = vpop.permute.xlu0 %437
  %v440 = vadd.f32 %v430, %v438
  %v441 = vtanh.pop %v440
  %443 = vrot.lane.b32.xlu0 %v441, 64
  %v444 = vpop.permute.xlu0 %443
  %v446 = vmul.f32 %v429, %v444
  %448 = vrot.lane.b32.xlu0 %v446, 32
  %v449 = vpop.permute.xlu0 %448
  %451 = vst.msk [vmem:[#allocation2 + $0x8] sm:$0xff] %vm295, %v449
  %v452 = vpack.c.bf16 %v446, %v446
  %454 = vrot.lane.b32.xlu0 %v452, 32
  %v455 = vpop.permute.xlu0 %454
  %v457 = vsel %vm295, %v455, 0
  %459 = vmatprep.subr.bf16.mxu0 0
  %460 = vmatpush1.bf16.msra.mxu0 %v291
  %461 = vmatprep.subr.bf16.mxu0 0
  %462 = vmatpush1.bf16.msra.mxu0 %v292
  %463 = vmatprep.subr.bf16.mxu0 0
  %464 = vmatpush1.bf16.msra.mxu0 0
  %465 = vmatprep.subr.bf16.mxu0 0
  %466 = vmatpush1.bf16.msra.mxu0 0
  %467 = vmatprep.subr.bf16.mxu0 0
  %468 = vmatpush1.bf16.msra.mxu0 0
  %469 = vmatprep.subr.bf16.mxu0 0
  %470 = vmatpush1.bf16.msra.mxu0 0
  %471 = vmatprep.subr.bf16.mxu0 0
  %472 = vmatpush1.bf16.msra.mxu0 0
  %473 = vmatprep.subr.bf16.mxu0 0
  %474 = vmatpush1.bf16.msra.mxu0 0
  %475 = vmatprep.subr.bf16.mxu0 0
  %476 = vmatpush1.bf16.msra.mxu0 0
  %477 = vmatprep.subr.bf16.mxu0 0
  %478 = vmatpush1.bf16.msra.mxu0 0
  %479 = vmatprep.subr.bf16.mxu0 0
  %480 = vmatpush1.bf16.msra.mxu0 0
  %481 = vmatprep.subr.bf16.mxu0 0
  %482 = vmatpush1.bf16.msra.mxu0 0
  %483 = vmatprep.subr.bf16.mxu0 0
  %484 = vmatpush1.bf16.msra.mxu0 0
  %485 = vmatprep.subr.bf16.mxu0 0
  %486 = vmatpush1.bf16.msra.mxu0 0
  %487 = vmatprep.subr.bf16.mxu0 0
  %488 = vmatpush1.bf16.msra.mxu0 0
  %489 = vmatprep.subr.bf16.mxu0 0
  %490 = vmatpush1.bf16.msra.mxu0 0
  %491 = vmatprep.mubr.bf16.mxu0 0
  %492 = vmatmul.mubr.bf16.gmra.mrb[0].mxu0 %v457
  %v493 = vpop.f32.mrb[0].mxu0
  %v494 = vadd.f32 0.0, %v493
  %v495 = vpop.f32.mrb[0].mxu0
  %v496 = vpop.f32.mrb[0].mxu0
  %v497 = vpop.f32.mrb[0].mxu0
  %498 = vdwg.mxu0
  %v499 = vadd.f32 %v254, %v494
  %v500 = vtanh.pop %v499
  %v501 = vxor.u32 %v499, 2147483648
  %v502 = vmul.f32 %v501, 1.442695
  %v503 = vpow.pop %v502
  %v504 = vadd.f32 %v503, 1.0
  %v505 = vrcp.pop %v504
  %v506 = vmul.f32 1.0, %v505
  %v507 = vsel %vm178, %v500, %v506
  %v508 = vmul.f32 %v507, %v440
  %510 = vrot.lane.b32.xlu0 %v507, 64
  %v511 = vpop.permute.xlu0 %510
  %v513 = vmul.f32 %v507, %v511
  %515 = vrot.lane.b32.xlu0 %v513, 32
  %v516 = vpop.permute.xlu0 %515
  %v518 = vadd.f32 %v508, %v516
  %v519 = vtanh.pop %v518
  %521 = vrot.lane.b32.xlu0 %v519, 64
  %v522 = vpop.permute.xlu0 %521
  %v524 = vmul.f32 %v507, %v522
  %526 = vrot.lane.b32.xlu0 %v524, 32
  %v527 = vpop.permute.xlu0 %526
  %529 = vst.msk [vmem:[#allocation2 + $0x10] sm:$0xff] %vm295, %v527
  %v530 = vpack.c.bf16 %v524, %v524
  %532 = vrot.lane.b32.xlu0 %v530, 32
  %v533 = vpop.permute.xlu0 %532
  %v535 = vsel %vm295, %v533, 0
  %537 = vmatprep.subr.bf16.mxu0 0
  %538 = vmatpush1.bf16.msra.mxu0 %v291
  %539 = vmatprep.subr.bf16.mxu0 0
  %540 = vmatpush1.bf16.msra.mxu0 %v292
  %541 = vmatprep.subr.bf16.mxu0 0
  %542 = vmatpush1.bf16.msra.mxu0 0
  %543 = vmatprep.subr.bf16.mxu0 0
  %544 = vmatpush1.bf16.msra.mxu0 0
  %545 = vmatprep.subr.bf16.mxu0 0
  %546 = vmatpush1.bf16.msra.mxu0 0
  %547 = vmatprep.subr.bf16.mxu0 0
  %548 = vmatpush1.bf16.msra.mxu0 0
  %549 = vmatprep.subr.bf16.mxu0 0
  %550 = vmatpush1.bf16.msra.mxu0 0
  %551 = vmatprep.subr.bf16.mxu0 0
  %552 = vmatpush1.bf16.msra.mxu0 0
  %553 = vmatprep.subr.bf16.mxu0 0
  %554 = vmatpush1.bf16.msra.mxu0 0
  %555 = vmatprep.subr.bf16.mxu0 0
  %556 = vmatpush1.bf16.msra.mxu0 0
  %557 = vmatprep.subr.bf16.mxu0 0
  %558 = vmatpush1.bf16.msra.mxu0 0
  %559 = vmatprep.subr.bf16.mxu0 0
  %560 = vmatpush1.bf16.msra.mxu0 0
  %561 = vmatprep.subr.bf16.mxu0 0
  %562 = vmatpush1.bf16.msra.mxu0 0
  %563 = vmatprep.subr.bf16.mxu0 0
  %564 = vmatpush1.bf16.msra.mxu0 0
  %565 = vmatprep.subr.bf16.mxu0 0
  %566 = vmatpush1.bf16.msra.mxu0 0
  %567 = vmatprep.subr.bf16.mxu0 0
  %568 = vmatpush1.bf16.msra.mxu0 0
  %569 = vmatprep.mubr.bf16.mxu0 0
  %570 = vmatmul.mubr.bf16.gmra.mrb[0].mxu0 %v535
  %v571 = vpop.f32.mrb[0].mxu0
  %v572 = vadd.f32 0.0, %v571
  %v573 = vpop.f32.mrb[0].mxu0
  %v574 = vpop.f32.mrb[0].mxu0
  %v575 = vpop.f32.mrb[0].mxu0
  %576 = vdwg.mxu0
  %v577 = vadd.f32 %v257, %v572
  %v578 = vtanh.pop %v577
  %v579 = vxor.u32 %v577, 2147483648
  %v580 = vmul.f32 %v579, 1.442695
  %v581 = vpow.pop %v580
  %v582 = vadd.f32 %v581, 1.0
  %v583 = vrcp.pop %v582
  %v584 = vmul.f32 1.0, %v583
  %v585 = vsel %vm178, %v578, %v584
  %v586 = vmul.f32 %v585, %v518
  %588 = vrot.lane.b32.xlu0 %v585, 64
  %v589 = vpop.permute.xlu0 %588
  %v591 = vmul.f32 %v585, %v589
  %593 = vrot.lane.b32.xlu0 %v591, 32
  %v594 = vpop.permute.xlu0 %593
  %v596 = vadd.f32 %v586, %v594
  %v597 = vtanh.pop %v596
  %599 = vrot.lane.b32.xlu0 %v597, 64
  %v600 = vpop.permute.xlu0 %599
  %v602 = vmul.f32 %v585, %v600
  %604 = vrot.lane.b32.xlu0 %v602, 32
  %v605 = vpop.permute.xlu0 %604
  %607 = vst.msk [vmem:[#allocation2 + $0x18] sm:$0xff] %vm295, %v605
  %v608 = vpack.c.bf16 %v602, %v602
  %610 = vrot.lane.b32.xlu0 %v608, 32
  %v611 = vpop.permute.xlu0 %610
  %v613 = vsel %vm295, %v611, 0
  %615 = vmatprep.subr.bf16.mxu0 0
  %616 = vmatpush1.bf16.msra.mxu0 %v291
  %617 = vmatprep.subr.bf16.mxu0 0
  %618 = vmatpush1.bf16.msra.mxu0 %v292
  %619 = vmatprep.subr.bf16.mxu0 0
  %620 = vmatpush1.bf16.msra.mxu0 0
  %621 = vmatprep.subr.bf16.mxu0 0
  %622 = vmatpush1.bf16.msra.mxu0 0
  %623 = vmatprep.subr.bf16.mxu0 0
  %624 = vmatpush1.bf16.msra.mxu0 0
  %625 = vmatprep.subr.bf16.mxu0 0
  %626 = vmatpush1.bf16.msra.mxu0 0
  %627 = vmatprep.subr.bf16.mxu0 0
  %628 = vmatpush1.bf16.msra.mxu0 0
  %629 = vmatprep.subr.bf16.mxu0 0
  %630 = vmatpush1.bf16.msra.mxu0 0
  %631 = vmatprep.subr.bf16.mxu0 0
  %632 = vmatpush1.bf16.msra.mxu0 0
  %633 = vmatprep.subr.bf16.mxu0 0
  %634 = vmatpush1.bf16.msra.mxu0 0
  %635 = vmatprep.subr.bf16.mxu0 0
  %636 = vmatpush1.bf16.msra.mxu0 0
  %637 = vmatprep.subr.bf16.mxu0 0
  %638 = vmatpush1.bf16.msra.mxu0 0
  %639 = vmatprep.subr.bf16.mxu0 0
  %640 = vmatpush1.bf16.msra.mxu0 0
  %641 = vmatprep.subr.bf16.mxu0 0
  %642 = vmatpush1.bf16.msra.mxu0 0
  %643 = vmatprep.subr.bf16.mxu0 0
  %644 = vmatpush1.bf16.msra.mxu0 0
  %645 = vmatprep.subr.bf16.mxu0 0
  %646 = vmatpush1.bf16.msra.mxu0 0
  %647 = vmatprep.mubr.bf16.mxu0 0
  %648 = vmatmul.mubr.bf16.gmra.mrb[0].mxu0 %v613
  %v649 = vpop.f32.mrb[0].mxu0
  %v650 = vadd.f32 0.0, %v649
  %v651 = vpop.f32.mrb[0].mxu0
  %v652 = vpop.f32.mrb[0].mxu0
  %v653 = vpop.f32.mrb[0].mxu0
  %654 = vdwg.mxu0
  %v655 = vadd.f32 %v262, %v650
  %v656 = vtanh.pop %v655
  %v657 = vxor.u32 %v655, 2147483648
  %v658 = vmul.f32 %v657, 1.442695
  %v659 = vpow.pop %v658
  %v660 = vadd.f32 %v659, 1.0
  %v661 = vrcp.pop %v660
  %v662 = vmul.f32 1.0, %v661
  %v663 = vsel %vm178, %v656, %v662
  %v664 = vmul.f32 %v663, %v596
  %666 = vrot.lane.b32.xlu0 %v663, 64
  %v667 = vpop.permute.xlu0 %666
  %v669 = vmul.f32 %v663, %v667
  %671 = vrot.lane.b32.xlu0 %v669, 32
  %v672 = vpop.permute.xlu0 %671
  %v674 = vadd.f32 %v664, %v672
  %v675 = vtanh.pop %v674
  %677 = vrot.lane.b32.xlu0 %v675, 64
  %v678 = vpop.permute.xlu0 %677
  %v680 = vmul.f32 %v663, %v678
  %682 = vrot.lane.b32.xlu0 %v680, 32
  %v683 = vpop.permute.xlu0 %682
  %685 = vst.msk [vmem:[#allocation2 + $0x20] sm:$0xff] %vm295, %v683
  %v686 = vpack.c.bf16 %v680, %v680
  %688 = vrot.lane.b32.xlu0 %v686, 32
  %v689 = vpop.permute.xlu0 %688
  %v691 = vsel %vm295, %v689, 0
  %693 = vmatprep.subr.bf16.mxu0 0
  %694 = vmatpush1.bf16.msra.mxu0 %v291
  %695 = vmatprep.subr.bf16.mxu0 0
  %696 = vmatpush1.bf16.msra.mxu0 %v292
  %697 = vmatprep.subr.bf16.mxu0 0
  %698 = vmatpush1.bf16.msra.mxu0 0
  %699 = vmatprep.subr.bf16.mxu0 0
  %700 = vmatpush1.bf16.msra.mxu0 0
  %701 = vmatprep.subr.bf16.mxu0 0
  %702 = vmatpush1.bf16.msra.mxu0 0
  %703 = vmatprep.subr.bf16.mxu0 0
  %704 = vmatpush1.bf16.msra.mxu0 0
  %705 = vmatprep.subr.bf16.mxu0 0
  %706 = vmatpush1.bf16.msra.mxu0 0
  %707 = vmatprep.subr.bf16.mxu0 0
  %708 = vmatpush1.bf16.msra.mxu0 0
  %709 = vmatprep.subr.bf16.mxu0 0
  %710 = vmatpush1.bf16.msra.mxu0 0
  %711 = vmatprep.subr.bf16.mxu0 0
  %712 = vmatpush1.bf16.msra.mxu0 0
  %713 = vmatprep.subr.bf16.mxu0 0
  %714 = vmatpush1.bf16.msra.mxu0 0
  %715 = vmatprep.subr.bf16.mxu0 0
  %716 = vmatpush1.bf16.msra.mxu0 0
  %717 = vmatprep.subr.bf16.mxu0 0
  %718 = vmatpush1.bf16.msra.mxu0 0
  %719 = vmatprep.subr.bf16.mxu0 0
  %720 = vmatpush1.bf16.msra.mxu0 0
  %721 = vmatprep.subr.bf16.mxu0 0
  %722 = vmatpush1.bf16.msra.mxu0 0
  %723 = vmatprep.subr.bf16.mxu0 0
  %724 = vmatpush1.bf16.msra.mxu0 0
  %725 = vmatprep.mubr.bf16.mxu0 0
  %726 = vmatmul.mubr.bf16.gmra.mrb[0].mxu0 %v691
  %v727 = vpop.f32.mrb[0].mxu0
  %v728 = vadd.f32 0.0, %v727
  %v729 = vpop.f32.mrb[0].mxu0
  %v730 = vpop.f32.mrb[0].mxu0
  %v731 = vpop.f32.mrb[0].mxu0
  %732 = vdwg.mxu0
  %v733 = vadd.f32 %v265, %v728
  %v734 = vtanh.pop %v733
  %v735 = vxor.u32 %v733, 2147483648
  %v736 = vmul.f32 %v735, 1.442695
  %v737 = vpow.pop %v736
  %v738 = vadd.f32 %v737, 1.0
  %v739 = vrcp.pop %v738
  %v740 = vmul.f32 1.0, %v739
  %v741 = vsel %vm178, %v734, %v740
  %v742 = vmul.f32 %v741, %v674
  %744 = vrot.lane.b32.xlu0 %v741, 64
  %v745 = vpop.permute.xlu0 %744
  %v747 = vmul.f32 %v741, %v745
  %749 = vrot.lane.b32.xlu0 %v747, 32
  %v750 = vpop.permute.xlu0 %749
  %v752 = vadd.f32 %v742, %v750
  %v753 = vtanh.pop %v752
  %755 = vrot.lane.b32.xlu0 %v753, 64
  %v756 = vpop.permute.xlu0 %755
  %v758 = vmul.f32 %v741, %v756
  %760 = vrot.lane.b32.xlu0 %v758, 32
  %v761 = vpop.permute.xlu0 %760
  %763 = vst.msk [vmem:[#allocation2 + $0x28] sm:$0xff] %vm295, %v761
  %v764 = vpack.c.bf16 %v758, %v758
  %766 = vrot.lane.b32.xlu0 %v764, 32
  %v767 = vpop.permute.xlu0 %766
  %v769 = vsel %vm295, %v767, 0
  %771 = vmatprep.subr.bf16.mxu0 0
  %772 = vmatpush1.bf16.msra.mxu0 %v291
  %773 = vmatprep.subr.bf16.mxu0 0
  %774 = vmatpush1.bf16.msra.mxu0 %v292
  %775 = vmatprep.subr.bf16.mxu0 0
  %776 = vmatpush1.bf16.msra.mxu0 0
  %777 = vmatprep.subr.bf16.mxu0 0
  %778 = vmatpush1.bf16.msra.mxu0 0
  %779 = vmatprep.subr.bf16.mxu0 0
  %780 = vmatpush1.bf16.msra.mxu0 0
  %781 = vmatprep.subr.bf16.mxu0 0
  %782 = vmatpush1.bf16.msra.mxu0 0
  %783 = vmatprep.subr.bf16.mxu0 0
  %784 = vmatpush1.bf16.msra.mxu0 0
  %785 = vmatprep.subr.bf16.mxu0 0
  %786 = vmatpush1.bf16.msra.mxu0 0
  %787 = vmatprep.subr.bf16.mxu0 0
  %788 = vmatpush1.bf16.msra.mxu0 0
  %789 = vmatprep.subr.bf16.mxu0 0
  %790 = vmatpush1.bf16.msra.mxu0 0
  %791 = vmatprep.subr.bf16.mxu0 0
  %792 = vmatpush1.bf16.msra.mxu0 0
  %793 = vmatprep.subr.bf16.mxu0 0
  %794 = vmatpush1.bf16.msra.mxu0 0
  %795 = vmatprep.subr.bf16.mxu0 0
  %796 = vmatpush1.bf16.msra.mxu0 0
  %797 = vmatprep.subr.bf16.mxu0 0
  %798 = vmatpush1.bf16.msra.mxu0 0
  %799 = vmatprep.subr.bf16.mxu0 0
  %800 = vmatpush1.bf16.msra.mxu0 0
  %801 = vmatprep.subr.bf16.mxu0 0
  %802 = vmatpush1.bf16.msra.mxu0 0
  %803 = vmatprep.mubr.bf16.mxu0 0
  %804 = vmatmul.mubr.bf16.gmra.mrb[0].mxu0 %v769
  %v805 = vpop.f32.mrb[0].mxu0
  %v806 = vadd.f32 0.0, %v805
  %v807 = vpop.f32.mrb[0].mxu0
  %v808 = vpop.f32.mrb[0].mxu0
  %v809 = vpop.f32.mrb[0].mxu0
  %810 = vdwg.mxu0
  %v811 = vadd.f32 %v270, %v806
  %v812 = vtanh.pop %v811
  %v813 = vxor.u32 %v811, 2147483648
  %v814 = vmul.f32 %v813, 1.442695
  %v815 = vpow.pop %v814
  %v816 = vadd.f32 %v815, 1.0
  %v817 = vrcp.pop %v816
  %v818 = vmul.f32 1.0, %v817
  %v819 = vsel %vm178, %v812, %v818
  %v820 = vmul.f32 %v819, %v752
  %822 = vrot.lane.b32.xlu0 %v819, 64
  %v823 = vpop.permute.xlu0 %822
  %v825 = vmul.f32 %v819, %v823
  %827 = vrot.lane.b32.xlu0 %v825, 32
  %v828 = vpop.permute.xlu0 %827
  %v830 = vadd.f32 %v820, %v828
  %v831 = vtanh.pop %v830
  %833 = vrot.lane.b32.xlu0 %v831, 64
  %v834 = vpop.permute.xlu0 %833
  %v836 = vmul.f32 %v819, %v834
  %838 = vrot.lane.b32.xlu0 %v836, 32
  %v839 = vpop.permute.xlu0 %838
  %841 = vst.msk [vmem:[#allocation2 + $0x30] sm:$0xff] %vm295, %v839
  %v842 = vpack.c.bf16 %v836, %v836
  %844 = vrot.lane.b32.xlu0 %v842, 32
  %v845 = vpop.permute.xlu0 %844
  %v847 = vsel %vm295, %v845, 0
  %849 = vmatprep.subr.bf16.mxu0 0
  %850 = vmatpush1.bf16.msra.mxu0 %v291
  %851 = vmatprep.subr.bf16.mxu0 0
  %852 = vmatpush1.bf16.msra.mxu0 %v292
  %853 = vmatprep.subr.bf16.mxu0 0
  %854 = vmatpush1.bf16.msra.mxu0 0
  %855 = vmatprep.subr.bf16.mxu0 0
  %856 = vmatpush1.bf16.msra.mxu0 0
  %857 = vmatprep.subr.bf16.mxu0 0
  %858 = vmatpush1.bf16.msra.mxu0 0
  %859 = vmatprep.subr.bf16.mxu0 0
  %860 = vmatpush1.bf16.msra.mxu0 0
  %861 = vmatprep.subr.bf16.mxu0 0
  %862 = vmatpush1.bf16.msra.mxu0 0
  %863 = vmatprep.subr.bf16.mxu0 0
  %864 = vmatpush1.bf16.msra.mxu0 0
  %865 = vmatprep.subr.bf16.mxu0 0
  %866 = vmatpush1.bf16.msra.mxu0 0
  %867 = vmatprep.subr.bf16.mxu0 0
  %868 = vmatpush1.bf16.msra.mxu0 0
  %869 = vmatprep.subr.bf16.mxu0 0
  %870 = vmatpush1.bf16.msra.mxu0 0
  %871 = vmatprep.subr.bf16.mxu0 0
  %872 = vmatpush1.bf16.msra.mxu0 0
  %873 = vmatprep.subr.bf16.mxu0 0
  %874 = vmatpush1.bf16.msra.mxu0 0
  %875 = vmatprep.subr.bf16.mxu0 0
  %876 = vmatpush1.bf16.msra.mxu0 0
  %877 = vmatprep.subr.bf16.mxu0 0
  %878 = vmatpush1.bf16.msra.mxu0 0
  %879 = vmatprep.subr.bf16.mxu0 0
  %880 = vmatpush1.bf16.msra.mxu0 0
  %881 = vmatprep.mubr.bf16.mxu0 0
  %882 = vmatmul.mubr.bf16.gmra.mrb[0].mxu0 %v847
  %v883 = vpop.f32.mrb[0].mxu0
  %v884 = vadd.f32 0.0, %v883
  %v885 = vpop.f32.mrb[0].mxu0
  %v886 = vpop.f32.mrb[0].mxu0
  %v887 = vpop.f32.mrb[0].mxu0
  %888 = vdwg.mxu0
  %v889 = vadd.f32 %v273, %v884
  %v890 = vtanh.pop %v889
  %v891 = vxor.u32 %v889, 2147483648
  %v892 = vmul.f32 %v891, 1.442695
  %v893 = vpow.pop %v892
  %v894 = vadd.f32 %v893, 1.0
  %v895 = vrcp.pop %v894
  %v896 = vmul.f32 1.0, %v895
  %v897 = vsel %vm178, %v890, %v896
  %v898 = vmul.f32 %v897, %v830
  %900 = vrot.lane.b32.xlu0 %v897, 64
  %v901 = vpop.permute.xlu0 %900
  %v903 = vmul.f32 %v897, %v901
  %905 = vrot.lane.b32.xlu0 %v903, 32
  %v906 = vpop.permute.xlu0 %905
  %v908 = vadd.f32 %v898, %v906
  %v909 = vtanh.pop %v908
  %911 = vrot.lane.b32.xlu0 %v909, 64
  %v912 = vpop.permute.xlu0 %911
  %v914 = vmul.f32 %v897, %v912
  %916 = vrot.lane.b32.xlu0 %v914, 32
  %v917 = vpop.permute.xlu0 %916
  %919 = vst.msk [vmem:[#allocation2 + $0x38] sm:$0xff] %vm295, %v917
  %920 = vst.msk [vmem:[%s14] sm:$0xff] %vm295, %v917
  %922 = vrot.lane.b32.xlu0 %v908, 96
  %v923 = vpop.permute.xlu0 %922
  %925 = vst.msk [vmem:[%s15] sm:$0xff] %vm295, %v923
  %v926 = vld [vmem:[#allocation2] sm:$0xff]
  %v927 = vld [vmem:[#allocation2 + $0x8] sm:$0xff]
  %v928 = vld [vmem:[#allocation2 + $0x10] sm:$0xff]
  %v929 = vld [vmem:[#allocation2 + $0x18] sm:$0xff]
  %v930 = vld [vmem:[#allocation2 + $0x20] sm:$0xff]
  %v931 = vld [vmem:[#allocation2 + $0x28] sm:$0xff]
  %v932 = vld [vmem:[#allocation2 + $0x30] sm:$0xff]
  %v933 = vld [vmem:[#allocation2 + $0x38] sm:$0xff]
  %v934 = vpack.c.bf16 %v927, %v926
  %v935 = vpack.c.bf16 %v929, %v928
  %v936 = vpack.c.bf16 %v931, %v930
  %v937 = vpack.c.bf16 %v933, %v932
  %v938 = vld [vmem:[%s6] sm:$0xf]
  %v939 = vld [vmem:[%s6 + $0x4] sm:$0xf]
  %v940 = vld [vmem:[%s6 + $0x8] sm:$0xf]
  %v941 = vld [vmem:[%s6 + $0xc] sm:$0xf]
  %v942 = vld [vmem:[%s8] sm:$0x1]
  %v944 = vlaneseq
  %v945 = vshrl.u32 %v944, 7
  %v946 = vsub.s32 0, %v945
  %v947 = vrot.slane %v942, %v946
  %v953 = vunpack.c.l.b16 %v938
  %v954 = vunpack.c.l.b16 %v939
  %v955 = vunpack.c.l.b16 %v940
  %v956 = vunpack.c.l.b16 %v941
  %v957 = vpack.c.b16 %v954, %v953
  %v958 = vpack.c.b16 %v956, %v955
  %v962 = vsel %vm295, %v934, 0
  %v965 = vsel %vm295, %v935, 0
  %v968 = vsel %vm295, %v936, 0
  %v971 = vsel %vm295, %v937, 0
  %973 = vmatprep.subr.bf16.mxu0 0
  %974 = vmatpush1.bf16.msra.mxu0 %v957
  %975 = vmatprep.subr.bf16.mxu0 0
  %976 = vmatpush1.bf16.msra.mxu0 %v958
  %977 = vmatprep.subr.bf16.mxu0 0
  %978 = vmatpush1.bf16.msra.mxu0 0
  %979 = vmatprep.subr.bf16.mxu0 0
  %980 = vmatpush1.bf16.msra.mxu0 0
  %981 = vmatprep.subr.bf16.mxu0 0
  %982 = vmatpush1.bf16.msra.mxu0 0
  %983 = vmatprep.subr.bf16.mxu0 0
  %984 = vmatpush1.bf16.msra.mxu0 0
  %985 = vmatprep.subr.bf16.mxu0 0
  %986 = vmatpush1.bf16.msra.mxu0 0
  %987 = vmatprep.subr.bf16.mxu0 0
  %988 = vmatpush1.bf16.msra.mxu0 0
  %989 = vmatprep.subr.bf16.mxu0 0
  %990 = vmatpush1.bf16.msra.mxu0 0
  %991 = vmatprep.subr.bf16.mxu0 0
  %992 = vmatpush1.bf16.msra.mxu0 0
  %993 = vmatprep.subr.bf16.mxu0 0
  %994 = vmatpush1.bf16.msra.mxu0 0
  %995 = vmatprep.subr.bf16.mxu0 0
  %996 = vmatpush1.bf16.msra.mxu0 0
  %997 = vmatprep.subr.bf16.mxu0 0
  %998 = vmatpush1.bf16.msra.mxu0 0
  %999 = vmatprep.subr.bf16.mxu0 0
  %1000 = vmatpush1.bf16.msra.mxu0 0
  %1001 = vmatprep.subr.bf16.mxu0 0
  %1002 = vmatpush1.bf16.msra.mxu0 0
  %1003 = vmatprep.subr.bf16.mxu0 0
  %1004 = vmatpush1.bf16.msra.mxu0 0
  %1005 = vmatprep.mubr.bf16.mxu0 0
  %1006 = vmatmul.mubr.bf16.gmra.mrb[0].mxu0 %v962
  %v1007 = vpop.f32.mrb[0].mxu0
  %v1008 = vadd.f32 %v947, %v1007
  %v1009 = vpop.f32.mrb[0].mxu0
  %v1010 = vpop.f32.mrb[0].mxu0
  %v1011 = vadd.f32 %v947, %v1010
  %v1012 = vpop.f32.mrb[0].mxu0
  %1013 = vmatprep.mubr.bf16.mxu0 0
  %1014 = vmatmul.mubr.bf16.gmra.mrb[0].mxu0 %v965
  %v1015 = vpop.f32.mrb[0].mxu0
  %v1016 = vadd.f32 %v947, %v1015
  %v1017 = vpop.f32.mrb[0].mxu0
  %v1018 = vpop.f32.mrb[0].mxu0
  %v1019 = vadd.f32 %v947, %v1018
  %v1020 = vpop.f32.mrb[0].mxu0
  %1021 = vmatprep.mubr.bf16.mxu0 0
  %1022 = vmatmul.mubr.bf16.gmra.mrb[0].mxu0 %v968
  %v1023 = vpop.f32.mrb[0].mxu0
  %v1024 = vadd.f32 %v947, %v1023
  %v1025 = vpop.f32.mrb[0].mxu0
  %v1026 = vpop.f32.mrb[0].mxu0
  %v1027 = vadd.f32 %v947, %v1026
  %v1028 = vpop.f32.mrb[0].mxu0
  %1029 = vmatprep.mubr.bf16.mxu0 0
  %1030 = vmatmul.mubr.bf16.gmra.mrb[0].mxu0 %v971
  %v1031 = vpop.f32.mrb[0].mxu0
  %v1032 = vadd.f32 %v947, %v1031
  %v1033 = vpop.f32.mrb[0].mxu0
  %v1034 = vpop.f32.mrb[0].mxu0
  %v1035 = vadd.f32 %v947, %v1034
  %v1036 = vpop.f32.mrb[0].mxu0
  %1037 = vdwg.mxu0
  %v1038 = vld [vmem:[%s7] sm:$0xf]
  %v1039 = vld [vmem:[%s7 + $0x4] sm:$0xf]
  %v1040 = vld [vmem:[%s7 + $0x8] sm:$0xf]
  %v1041 = vld [vmem:[%s7 + $0xc] sm:$0xf]
  %s1042 = scalar_lea.vmem %s11, 8
  %v1043 = vld [vmem:[%s1042] sm:$0xff]
  %s1044 = scalar_lea.vmem %s12, 8
  %v1045 = vld [vmem:[%s1044] sm:$0xff]
  %v1046 = vpack.c.bf16 %v1043, %v1043
  %v1051 = vunpack.c.l.b16 %v1038
  %v1052 = vunpack.c.l.b16 %v1039
  %v1053 = vunpack.c.l.b16 %v1040
  %v1054 = vunpack.c.l.b16 %v1041
  %v1055 = vpack.c.b16 %v1052, %v1051
  %v1056 = vpack.c.b16 %v1054, %v1053
  %v1060 = vsel %vm295, %v1046, 0
  %1062 = vmatprep.subr.bf16.mxu0 0
  %1063 = vmatpush1.bf16.msra.mxu0 %v1055
  %1064 = vmatprep.subr.bf16.mxu0 0
  %1065 = vmatpush1.bf16.msra.mxu0 %v1056
  %1066 = vmatprep.subr.bf16.mxu0 0
  %1067 = vmatpush1.bf16.msra.mxu0 0
  %1068 = vmatprep.subr.bf16.mxu0 0
  %1069 = vmatpush1.bf16.msra.mxu0 0
  %1070 = vmatprep.subr.bf16.mxu0 0
  %1071 = vmatpush1.bf16.msra.mxu0 0
  %1072 = vmatprep.subr.bf16.mxu0 0
  %1073 = vmatpush1.bf16.msra.mxu0 0
  %1074 = vmatprep.subr.bf16.mxu0 0
  %1075 = vmatpush1.bf16.msra.mxu0 0
  %1076 = vmatprep.subr.bf16.mxu0 0
  %1077 = vmatpush1.bf16.msra.mxu0 0
  %1078 = vmatprep.subr.bf16.mxu0 0
  %1079 = vmatpush1.bf16.msra.mxu0 0
  %1080 = vmatprep.subr.bf16.mxu0 0
  %1081 = vmatpush1.bf16.msra.mxu0 0
  %1082 = vmatprep.subr.bf16.mxu0 0
  %1083 = vmatpush1.bf16.msra.mxu0 0
  %1084 = vmatprep.subr.bf16.mxu0 0
  %1085 = vmatpush1.bf16.msra.mxu0 0
  %1086 = vmatprep.subr.bf16.mxu0 0
  %1087 = vmatpush1.bf16.msra.mxu0 0
  %1088 = vmatprep.subr.bf16.mxu0 0
  %1089 = vmatpush1.bf16.msra.mxu0 0
  %1090 = vmatprep.subr.bf16.mxu0 0
  %1091 = vmatpush1.bf16.msra.mxu0 0
  %1092 = vmatprep.subr.bf16.mxu0 0
  %1093 = vmatpush1.bf16.msra.mxu0 0
  %1094 = vmatprep.mubr.bf16.mxu0 0
  %1095 = vmatmul.mubr.bf16.gmra.mrb[0].mxu0 %v1060
  %v1096 = vpop.f32.mrb[0].mxu0
  %v1097 = vadd.f32 0.0, %v1096
  %v1098 = vpop.f32.mrb[0].mxu0
  %v1099 = vpop.f32.mrb[0].mxu0
  %v1100 = vpop.f32.mrb[0].mxu0
  %1101 = vdwg.mxu0
  %v1102 = vadd.f32 %v1008, %v1097
  %v1103 = vtanh.pop %v1102
  %v1104 = vxor.u32 %v1102, 2147483648
  %v1105 = vmul.f32 %v1104, 1.442695
  %v1106 = vpow.pop %v1105
  %v1107 = vadd.f32 %v1106, 1.0
  %v1108 = vrcp.pop %v1107
  %v1109 = vmul.f32 1.0, %v1108
  %v1110 = vsel %vm178, %v1103, %v1109
  %1112 = vrot.lane.b32.xlu0 %v1045, 32
  %v1113 = vpop.permute.xlu0 %1112
  %v1115 = vmul.f32 %v1110, %v1113
  %1117 = vrot.lane.b32.xlu0 %v1110, 64
  %v1118 = vpop.permute.xlu0 %1117
  %v1120 = vmul.f32 %v1110, %v1118
  %1122 = vrot.lane.b32.xlu0 %v1120, 32
  %v1123 = vpop.permute.xlu0 %1122
  %v1125 = vadd.f32 %v1115, %v1123
  %v1126 = vtanh.pop %v1125
  %1128 = vrot.lane.b32.xlu0 %v1126, 64
  %v1129 = vpop.permute.xlu0 %1128
  %v1131 = vmul.f32 %v1110, %v1129
  %v1132 = vpack.c.bf16 %v1131, %v1131
  %1134 = vrot.lane.b32.xlu0 %v1132, 32
  %v1135 = vpop.permute.xlu0 %1134
  %v1137 = vsel %vm295, %v1135, 0
  %1139 = vmatprep.subr.bf16.mxu0 0
  %1140 = vmatpush1.bf16.msra.mxu0 %v1055
  %1141 = vmatprep.subr.bf16.mxu0 0
  %1142 = vmatpush1.bf16.msra.mxu0 %v1056
  %1143 = vmatprep.subr.bf16.mxu0 0
  %1144 = vmatpush1.bf16.msra.mxu0 0
  %1145 = vmatprep.subr.bf16.mxu0 0
  %1146 = vmatpush1.bf16.msra.mxu0 0
  %1147 = vmatprep.subr.bf16.mxu0 0
  %1148 = vmatpush1.bf16.msra.mxu0 0
  %1149 = vmatprep.subr.bf16.mxu0 0
  %1150 = vmatpush1.bf16.msra.mxu0 0
  %1151 = vmatprep.subr.bf16.mxu0 0
  %1152 = vmatpush1.bf16.msra.mxu0 0
  %1153 = vmatprep.subr.bf16.mxu0 0
  %1154 = vmatpush1.bf16.msra.mxu0 0
  %1155 = vmatprep.subr.bf16.mxu0 0
  %1156 = vmatpush1.bf16.msra.mxu0 0
  %1157 = vmatprep.subr.bf16.mxu0 0
  %1158 = vmatpush1.bf16.msra.mxu0 0
  %1159 = vmatprep.subr.bf16.mxu0 0
  %1160 = vmatpush1.bf16.msra.mxu0 0
  %1161 = vmatprep.subr.bf16.mxu0 0
  %1162 = vmatpush1.bf16.msra.mxu0 0
  %1163 = vmatprep.subr.bf16.mxu0 0
  %1164 = vmatpush1.bf16.msra.mxu0 0
  %1165 = vmatprep.subr.bf16.mxu0 0
  %1166 = vmatpush1.bf16.msra.mxu0 0
  %1167 = vmatprep.subr.bf16.mxu0 0
  %1168 = vmatpush1.bf16.msra.mxu0 0
  %1169 = vmatprep.subr.bf16.mxu0 0
  %1170 = vmatpush1.bf16.msra.mxu0 0
  %1171 = vmatprep.mubr.bf16.mxu0 0
  %1172 = vmatmul.mubr.bf16.gmra.mrb[0].mxu0 %v1137
  %v1173 = vpop.f32.mrb[0].mxu0
  %v1174 = vadd.f32 0.0, %v1173
  %v1175 = vpop.f32.mrb[0].mxu0
  %v1176 = vpop.f32.mrb[0].mxu0
  %v1177 = vpop.f32.mrb[0].mxu0
  %1178 = vdwg.mxu0
  %v1179 = vadd.f32 %v1011, %v1174
  %v1180 = vtanh.pop %v1179
  %v1181 = vxor.u32 %v1179, 2147483648
  %v1182 = vmul.f32 %v1181, 1.442695
  %v1183 = vpow.pop %v1182
  %v1184 = vadd.f32 %v1183, 1.0
  %v1185 = vrcp.pop %v1184
  %v1186 = vmul.f32 1.0, %v1185
  %v1187 = vsel %vm178, %v1180, %v1186
  %v1188 = vmul.f32 %v1187, %v1125
  %1190 = vrot.lane.b32.xlu0 %v1187, 64
  %v1191 = vpop.permute.xlu0 %1190
  %v1193 = vmul.f32 %v1187, %v1191
  %1195 = vrot.lane.b32.xlu0 %v1193, 32
  %v1196 = vpop.permute.xlu0 %1195
  %v1198 = vadd.f32 %v1188, %v1196
  %v1199 = vtanh.pop %v1198
  %1201 = vrot.lane.b32.xlu0 %v1199, 64
  %v1202 = vpop.permute.xlu0 %1201
  %v1204 = vmul.f32 %v1187, %v1202
  %v1205 = vpack.c.bf16 %v1204, %v1204
  %1207 = vrot.lane.b32.xlu0 %v1205, 32
  %v1208 = vpop.permute.xlu0 %1207
  %v1210 = vsel %vm295, %v1208, 0
  %1212 = vmatprep.subr.bf16.mxu0 0
  %1213 = vmatpush1.bf16.msra.mxu0 %v1055
  %1214 = vmatprep.subr.bf16.mxu0 0
  %1215 = vmatpush1.bf16.msra.mxu0 %v1056
  %1216 = vmatprep.subr.bf16.mxu0 0
  %1217 = vmatpush1.bf16.msra.mxu0 0
  %1218 = vmatprep.subr.bf16.mxu0 0
  %1219 = vmatpush1.bf16.msra.mxu0 0
  %1220 = vmatprep.subr.bf16.mxu0 0
  %1221 = vmatpush1.bf16.msra.mxu0 0
  %1222 = vmatprep.subr.bf16.mxu0 0
  %1223 = vmatpush1.bf16.msra.mxu0 0
  %1224 = vmatprep.subr.bf16.mxu0 0
  %1225 = vmatpush1.bf16.msra.mxu0 0
  %1226 = vmatprep.subr.bf16.mxu0 0
  %1227 = vmatpush1.bf16.msra.mxu0 0
  %1228 = vmatprep.subr.bf16.mxu0 0
  %1229 = vmatpush1.bf16.msra.mxu0 0
  %1230 = vmatprep.subr.bf16.mxu0 0
  %1231 = vmatpush1.bf16.msra.mxu0 0
  %1232 = vmatprep.subr.bf16.mxu0 0
  %1233 = vmatpush1.bf16.msra.mxu0 0
  %1234 = vmatprep.subr.bf16.mxu0 0
  %1235 = vmatpush1.bf16.msra.mxu0 0
  %1236 = vmatprep.subr.bf16.mxu0 0
  %1237 = vmatpush1.bf16.msra.mxu0 0
  %1238 = vmatprep.subr.bf16.mxu0 0
  %1239 = vmatpush1.bf16.msra.mxu0 0
  %1240 = vmatprep.subr.bf16.mxu0 0
  %1241 = vmatpush1.bf16.msra.mxu0 0
  %1242 = vmatprep.subr.bf16.mxu0 0
  %1243 = vmatpush1.bf16.msra.mxu0 0
  %1244 = vmatprep.mubr.bf16.mxu0 0
  %1245 = vmatmul.mubr.bf16.gmra.mrb[0].mxu0 %v1210
  %v1246 = vpop.f32.mrb[0].mxu0
  %v1247 = vadd.f32 0.0, %v1246
  %v1248 = vpop.f32.mrb[0].mxu0
  %v1249 = vpop.f32.mrb[0].mxu0
  %v1250 = vpop.f32.mrb[0].mxu0
  %1251 = vdwg.mxu0
  %v1252 = vadd.f32 %v1016, %v1247
  %v1253 = vtanh.pop %v1252
  %v1254 = vxor.u32 %v1252, 2147483648
  %v1255 = vmul.f32 %v1254, 1.442695
  %v1256 = vpow.pop %v1255
  %v1257 = vadd.f32 %v1256, 1.0
  %v1258 = vrcp.pop %v1257
  %v1259 = vmul.f32 1.0, %v1258
  %v1260 = vsel %vm178, %v1253, %v1259
  %v1261 = vmul.f32 %v1260, %v1198
  %1263 = vrot.lane.b32.xlu0 %v1260, 64
  %v1264 = vpop.permute.xlu0 %1263
  %v1266 = vmul.f32 %v1260, %v1264
  %1268 = vrot.lane.b32.xlu0 %v1266, 32
  %v1269 = vpop.permute.xlu0 %1268
  %v1271 = vadd.f32 %v1261, %v1269
  %v1272 = vtanh.pop %v1271
  %1274 = vrot.lane.b32.xlu0 %v1272, 64
  %v1275 = vpop.permute.xlu0 %1274
  %v1277 = vmul.f32 %v1260, %v1275
  %v1278 = vpack.c.bf16 %v1277, %v1277
  %1280 = vrot.lane.b32.xlu0 %v1278, 32
  %v1281 = vpop.permute.xlu0 %1280
  %v1283 = vsel %vm295, %v1281, 0
  %1285 = vmatprep.subr.bf16.mxu0 0
  %1286 = vmatpush1.bf16.msra.mxu0 %v1055
  %1287 = vmatprep.subr.bf16.mxu0 0
  %1288 = vmatpush1.bf16.msra.mxu0 %v1056
  %1289 = vmatprep.subr.bf16.mxu0 0
  %1290 = vmatpush1.bf16.msra.mxu0 0
  %1291 = vmatprep.subr.bf16.mxu0 0
  %1292 = vmatpush1.bf16.msra.mxu0 0
  %1293 = vmatprep.subr.bf16.mxu0 0
  %1294 = vmatpush1.bf16.msra.mxu0 0
  %1295 = vmatprep.subr.bf16.mxu0 0
  %1296 = vmatpush1.bf16.msra.mxu0 0
  %1297 = vmatprep.subr.bf16.mxu0 0
  %1298 = vmatpush1.bf16.msra.mxu0 0
  %1299 = vmatprep.subr.bf16.mxu0 0
  %1300 = vmatpush1.bf16.msra.mxu0 0
  %1301 = vmatprep.subr.bf16.mxu0 0
  %1302 = vmatpush1.bf16.msra.mxu0 0
  %1303 = vmatprep.subr.bf16.mxu0 0
  %1304 = vmatpush1.bf16.msra.mxu0 0
  %1305 = vmatprep.subr.bf16.mxu0 0
  %1306 = vmatpush1.bf16.msra.mxu0 0
  %1307 = vmatprep.subr.bf16.mxu0 0
  %1308 = vmatpush1.bf16.msra.mxu0 0
  %1309 = vmatprep.subr.bf16.mxu0 0
  %1310 = vmatpush1.bf16.msra.mxu0 0
  %1311 = vmatprep.subr.bf16.mxu0 0
  %1312 = vmatpush1.bf16.msra.mxu0 0
  %1313 = vmatprep.subr.bf16.mxu0 0
  %1314 = vmatpush1.bf16.msra.mxu0 0
  %1315 = vmatprep.subr.bf16.mxu0 0
  %1316 = vmatpush1.bf16.msra.mxu0 0
  %1317 = vmatprep.mubr.bf16.mxu0 0
  %1318 = vmatmul.mubr.bf16.gmra.mrb[0].mxu0 %v1283
  %v1319 = vpop.f32.mrb[0].mxu0
  %v1320 = vadd.f32 0.0, %v1319
  %v1321 = vpop.f32.mrb[0].mxu0
  %v1322 = vpop.f32.mrb[0].mxu0
  %v1323 = vpop.f32.mrb[0].mxu0
  %1324 = vdwg.mxu0
  %v1325 = vadd.f32 %v1019, %v1320
  %v1326 = vtanh.pop %v1325
  %v1327 = vxor.u32 %v1325, 2147483648
  %v1328 = vmul.f32 %v1327, 1.442695
  %v1329 = vpow.pop %v1328
  %v1330 = vadd.f32 %v1329, 1.0
  %v1331 = vrcp.pop %v1330
  %v1332 = vmul.f32 1.0, %v1331
  %v1333 = vsel %vm178, %v1326, %v1332
  %v1334 = vmul.f32 %v1333, %v1271
  %1336 = vrot.lane.b32.xlu0 %v1333, 64
  %v1337 = vpop.permute.xlu0 %1336
  %v1339 = vmul.f32 %v1333, %v1337
  %1341 = vrot.lane.b32.xlu0 %v1339, 32
  %v1342 = vpop.permute.xlu0 %1341
  %v1344 = vadd.f32 %v1334, %v1342
  %v1345 = vtanh.pop %v1344
  %1347 = vrot.lane.b32.xlu0 %v1345, 64
  %v1348 = vpop.permute.xlu0 %1347
  %v1350 = vmul.f32 %v1333, %v1348
  %v1351 = vpack.c.bf16 %v1350, %v1350
  %1353 = vrot.lane.b32.xlu0 %v1351, 32
  %v1354 = vpop.permute.xlu0 %1353
  %v1356 = vsel %vm295, %v1354, 0
  %1358 = vmatprep.subr.bf16.mxu0 0
  %1359 = vmatpush1.bf16.msra.mxu0 %v1055
  %1360 = vmatprep.subr.bf16.mxu0 0
  %1361 = vmatpush1.bf16.msra.mxu0 %v1056
  %1362 = vmatprep.subr.bf16.mxu0 0
  %1363 = vmatpush1.bf16.msra.mxu0 0
  %1364 = vmatprep.subr.bf16.mxu0 0
  %1365 = vmatpush1.bf16.msra.mxu0 0
  %1366 = vmatprep.subr.bf16.mxu0 0
  %1367 = vmatpush1.bf16.msra.mxu0 0
  %1368 = vmatprep.subr.bf16.mxu0 0
  %1369 = vmatpush1.bf16.msra.mxu0 0
  %1370 = vmatprep.subr.bf16.mxu0 0
  %1371 = vmatpush1.bf16.msra.mxu0 0
  %1372 = vmatprep.subr.bf16.mxu0 0
  %1373 = vmatpush1.bf16.msra.mxu0 0
  %1374 = vmatprep.subr.bf16.mxu0 0
  %1375 = vmatpush1.bf16.msra.mxu0 0
  %1376 = vmatprep.subr.bf16.mxu0 0
  %1377 = vmatpush1.bf16.msra.mxu0 0
  %1378 = vmatprep.subr.bf16.mxu0 0
  %1379 = vmatpush1.bf16.msra.mxu0 0
  %1380 = vmatprep.subr.bf16.mxu0 0
  %1381 = vmatpush1.bf16.msra.mxu0 0
  %1382 = vmatprep.subr.bf16.mxu0 0
  %1383 = vmatpush1.bf16.msra.mxu0 0
  %1384 = vmatprep.subr.bf16.mxu0 0
  %1385 = vmatpush1.bf16.msra.mxu0 0
  %1386 = vmatprep.subr.bf16.mxu0 0
  %1387 = vmatpush1.bf16.msra.mxu0 0
  %1388 = vmatprep.subr.bf16.mxu0 0
  %1389 = vmatpush1.bf16.msra.mxu0 0
  %1390 = vmatprep.mubr.bf16.mxu0 0
  %1391 = vmatmul.mubr.bf16.gmra.mrb[0].mxu0 %v1356
  %v1392 = vpop.f32.mrb[0].mxu0
  %v1393 = vadd.f32 0.0, %v1392
  %v1394 = vpop.f32.mrb[0].mxu0
  %v1395 = vpop.f32.mrb[0].mxu0
  %v1396 = vpop.f32.mrb[0].mxu0
  %1397 = vdwg.mxu0
  %v1398 = vadd.f32 %v1024, %v1393
  %v1399 = vtanh.pop %v1398
  %v1400 = vxor.u32 %v1398, 2147483648
  %v1401 = vmul.f32 %v1400, 1.442695
  %v1402 = vpow.pop %v1401
  %v1403 = vadd.f32 %v1402, 1.0
  %v1404 = vrcp.pop %v1403
  %v1405 = vmul.f32 1.0, %v1404
  %v1406 = vsel %vm178, %v1399, %v1405
  %v1407 = vmul.f32 %v1406, %v1344
  %1409 = vrot.lane.b32.xlu0 %v1406, 64
  %v1410 = vpop.permute.xlu0 %1409
  %v1412 = vmul.f32 %v1406, %v1410
  %1414 = vrot.lane.b32.xlu0 %v1412, 32
  %v1415 = vpop.permute.xlu0 %1414
  %v1417 = vadd.f32 %v1407, %v1415
  %v1418 = vtanh.pop %v1417
  %1420 = vrot.lane.b32.xlu0 %v1418, 64
  %v1421 = vpop.permute.xlu0 %1420
  %v1423 = vmul.f32 %v1406, %v1421
  %v1424 = vpack.c.bf16 %v1423, %v1423
  %1426 = vrot.lane.b32.xlu0 %v1424, 32
  %v1427 = vpop.permute.xlu0 %1426
  %v1429 = vsel %vm295, %v1427, 0
  %1431 = vmatprep.subr.bf16.mxu0 0
  %1432 = vmatpush1.bf16.msra.mxu0 %v1055
  %1433 = vmatprep.subr.bf16.mxu0 0
  %1434 = vmatpush1.bf16.msra.mxu0 %v1056
  %1435 = vmatprep.subr.bf16.mxu0 0
  %1436 = vmatpush1.bf16.msra.mxu0 0
  %1437 = vmatprep.subr.bf16.mxu0 0
  %1438 = vmatpush1.bf16.msra.mxu0 0
  %1439 = vmatprep.subr.bf16.mxu0 0
  %1440 = vmatpush1.bf16.msra.mxu0 0
  %1441 = vmatprep.subr.bf16.mxu0 0
  %1442 = vmatpush1.bf16.msra.mxu0 0
  %1443 = vmatprep.subr.bf16.mxu0 0
  %1444 = vmatpush1.bf16.msra.mxu0 0
  %1445 = vmatprep.subr.bf16.mxu0 0
  %1446 = vmatpush1.bf16.msra.mxu0 0
  %1447 = vmatprep.subr.bf16.mxu0 0
  %1448 = vmatpush1.bf16.msra.mxu0 0
  %1449 = vmatprep.subr.bf16.mxu0 0
  %1450 = vmatpush1.bf16.msra.mxu0 0
  %1451 = vmatprep.subr.bf16.mxu0 0
  %1452 = vmatpush1.bf16.msra.mxu0 0
  %1453 = vmatprep.subr.bf16.mxu0 0
  %1454 = vmatpush1.bf16.msra.mxu0 0
  %1455 = vmatprep.subr.bf16.mxu0 0
  %1456 = vmatpush1.bf16.msra.mxu0 0
  %1457 = vmatprep.subr.bf16.mxu0 0
  %1458 = vmatpush1.bf16.msra.mxu0 0
  %1459 = vmatprep.subr.bf16.mxu0 0
  %1460 = vmatpush1.bf16.msra.mxu0 0
  %1461 = vmatprep.subr.bf16.mxu0 0
  %1462 = vmatpush1.bf16.msra.mxu0 0
  %1463 = vmatprep.mubr.bf16.mxu0 0
  %1464 = vmatmul.mubr.bf16.gmra.mrb[0].mxu0 %v1429
  %v1465 = vpop.f32.mrb[0].mxu0
  %v1466 = vadd.f32 0.0, %v1465
  %v1467 = vpop.f32.mrb[0].mxu0
  %v1468 = vpop.f32.mrb[0].mxu0
  %v1469 = vpop.f32.mrb[0].mxu0
  %1470 = vdwg.mxu0
  %v1471 = vadd.f32 %v1027, %v1466
  %v1472 = vtanh.pop %v1471
  %v1473 = vxor.u32 %v1471, 2147483648
  %v1474 = vmul.f32 %v1473, 1.442695
  %v1475 = vpow.pop %v1474
  %v1476 = vadd.f32 %v1475, 1.0
  %v1477 = vrcp.pop %v1476
  %v1478 = vmul.f32 1.0, %v1477
  %v1479 = vsel %vm178, %v1472, %v1478
  %v1480 = vmul.f32 %v1479, %v1417
  %1482 = vrot.lane.b32.xlu0 %v1479, 64
  %v1483 = vpop.permute.xlu0 %1482
  %v1485 = vmul.f32 %v1479, %v1483
  %1487 = vrot.lane.b32.xlu0 %v1485, 32
  %v1488 = vpop.permute.xlu0 %1487
  %v1490 = vadd.f32 %v1480, %v1488
  %v1491 = vtanh.pop %v1490
  %1493 = vrot.lane.b32.xlu0 %v1491, 64
  %v1494 = vpop.permute.xlu0 %1493
  %v1496 = vmul.f32 %v1479, %v1494
  %v1497 = vpack.c.bf16 %v1496, %v1496
  %1499 = vrot.lane.b32.xlu0 %v1497, 32
  %v1500 = vpop.permute.xlu0 %1499
  %v1502 = vsel %vm295, %v1500, 0
  %1504 = vmatprep.subr.bf16.mxu0 0
  %1505 = vmatpush1.bf16.msra.mxu0 %v1055
  %1506 = vmatprep.subr.bf16.mxu0 0
  %1507 = vmatpush1.bf16.msra.mxu0 %v1056
  %1508 = vmatprep.subr.bf16.mxu0 0
  %1509 = vmatpush1.bf16.msra.mxu0 0
  %1510 = vmatprep.subr.bf16.mxu0 0
  %1511 = vmatpush1.bf16.msra.mxu0 0
  %1512 = vmatprep.subr.bf16.mxu0 0
  %1513 = vmatpush1.bf16.msra.mxu0 0
  %1514 = vmatprep.subr.bf16.mxu0 0
  %1515 = vmatpush1.bf16.msra.mxu0 0
  %1516 = vmatprep.subr.bf16.mxu0 0
  %1517 = vmatpush1.bf16.msra.mxu0 0
  %1518 = vmatprep.subr.bf16.mxu0 0
  %1519 = vmatpush1.bf16.msra.mxu0 0
  %1520 = vmatprep.subr.bf16.mxu0 0
  %1521 = vmatpush1.bf16.msra.mxu0 0
  %1522 = vmatprep.subr.bf16.mxu0 0
  %1523 = vmatpush1.bf16.msra.mxu0 0
  %1524 = vmatprep.subr.bf16.mxu0 0
  %1525 = vmatpush1.bf16.msra.mxu0 0
  %1526 = vmatprep.subr.bf16.mxu0 0
  %1527 = vmatpush1.bf16.msra.mxu0 0
  %1528 = vmatprep.subr.bf16.mxu0 0
  %1529 = vmatpush1.bf16.msra.mxu0 0
  %1530 = vmatprep.subr.bf16.mxu0 0
  %1531 = vmatpush1.bf16.msra.mxu0 0
  %1532 = vmatprep.subr.bf16.mxu0 0
  %1533 = vmatpush1.bf16.msra.mxu0 0
  %1534 = vmatprep.subr.bf16.mxu0 0
  %1535 = vmatpush1.bf16.msra.mxu0 0
  %1536 = vmatprep.mubr.bf16.mxu0 0
  %1537 = vmatmul.mubr.bf16.gmra.mrb[0].mxu0 %v1502
  %v1538 = vpop.f32.mrb[0].mxu0
  %v1539 = vadd.f32 0.0, %v1538
  %v1540 = vpop.f32.mrb[0].mxu0
  %v1541 = vpop.f32.mrb[0].mxu0
  %v1542 = vpop.f32.mrb[0].mxu0
  %1543 = vdwg.mxu0
  %v1544 = vadd.f32 %v1032, %v1539
  %v1545 = vtanh.pop %v1544
  %v1546 = vxor.u32 %v1544, 2147483648
  %v1547 = vmul.f32 %v1546, 1.442695
  %v1548 = vpow.pop %v1547
  %v1549 = vadd.f32 %v1548, 1.0
  %v1550 = vrcp.pop %v1549
  %v1551 = vmul.f32 1.0, %v1550
  %v1552 = vsel %vm178, %v1545, %v1551
  %v1553 = vmul.f32 %v1552, %v1490
  %1555 = vrot.lane.b32.xlu0 %v1552, 64
  %v1556 = vpop.permute.xlu0 %1555
  %v1558 = vmul.f32 %v1552, %v1556
  %1560 = vrot.lane.b32.xlu0 %v1558, 32
  %v1561 = vpop.permute.xlu0 %1560
  %v1563 = vadd.f32 %v1553, %v1561
  %v1564 = vtanh.pop %v1563
  %1566 = vrot.lane.b32.xlu0 %v1564, 64
  %v1567 = vpop.permute.xlu0 %1566
  %v1569 = vmul.f32 %v1552, %v1567
  %v1570 = vpack.c.bf16 %v1569, %v1569
  %1572 = vrot.lane.b32.xlu0 %v1570, 32
  %v1573 = vpop.permute.xlu0 %1572
  %v1575 = vsel %vm295, %v1573, 0
  %1577 = vmatprep.subr.bf16.mxu0 0
  %1578 = vmatpush1.bf16.msra.mxu0 %v1055
  %1579 = vmatprep.subr.bf16.mxu0 0
  %1580 = vmatpush1.bf16.msra.mxu0 %v1056
  %1581 = vmatprep.subr.bf16.mxu0 0
  %1582 = vmatpush1.bf16.msra.mxu0 0
  %1583 = vmatprep.subr.bf16.mxu0 0
  %1584 = vmatpush1.bf16.msra.mxu0 0
  %1585 = vmatprep.subr.bf16.mxu0 0
  %1586 = vmatpush1.bf16.msra.mxu0 0
  %1587 = vmatprep.subr.bf16.mxu0 0
  %1588 = vmatpush1.bf16.msra.mxu0 0
  %1589 = vmatprep.subr.bf16.mxu0 0
  %1590 = vmatpush1.bf16.msra.mxu0 0
  %1591 = vmatprep.subr.bf16.mxu0 0
  %1592 = vmatpush1.bf16.msra.mxu0 0
  %1593 = vmatprep.subr.bf16.mxu0 0
  %1594 = vmatpush1.bf16.msra.mxu0 0
  %1595 = vmatprep.subr.bf16.mxu0 0
  %1596 = vmatpush1.bf16.msra.mxu0 0
  %1597 = vmatprep.subr.bf16.mxu0 0
  %1598 = vmatpush1.bf16.msra.mxu0 0
  %1599 = vmatprep.subr.bf16.mxu0 0
  %1600 = vmatpush1.bf16.msra.mxu0 0
  %1601 = vmatprep.subr.bf16.mxu0 0
  %1602 = vmatpush1.bf16.msra.mxu0 0
  %1603 = vmatprep.subr.bf16.mxu0 0
  %1604 = vmatpush1.bf16.msra.mxu0 0
  %1605 = vmatprep.subr.bf16.mxu0 0
  %1606 = vmatpush1.bf16.msra.mxu0 0
  %1607 = vmatprep.subr.bf16.mxu0 0
  %1608 = vmatpush1.bf16.msra.mxu0 0
  %1609 = vmatprep.mubr.bf16.mxu0 0
  %1610 = vmatmul.mubr.bf16.gmra.mrb[0].mxu0 %v1575
  %v1611 = vpop.f32.mrb[0].mxu0
  %v1612 = vadd.f32 0.0, %v1611
  %v1613 = vpop.f32.mrb[0].mxu0
  %v1614 = vpop.f32.mrb[0].mxu0
  %v1615 = vpop.f32.mrb[0].mxu0
  %1616 = vdwg.mxu0
  %v1617 = vadd.f32 %v1035, %v1612
  %v1618 = vtanh.pop %v1617
  %v1619 = vxor.u32 %v1617, 2147483648
  %v1620 = vmul.f32 %v1619, 1.442695
  %v1621 = vpow.pop %v1620
  %v1622 = vadd.f32 %v1621, 1.0
  %v1623 = vrcp.pop %v1622
  %v1624 = vmul.f32 1.0, %v1623
  %v1625 = vsel %vm178, %v1618, %v1624
  %v1626 = vmul.f32 %v1625, %v1563
  %1628 = vrot.lane.b32.xlu0 %v1625, 64
  %v1629 = vpop.permute.xlu0 %1628
  %v1631 = vmul.f32 %v1625, %v1629
  %1633 = vrot.lane.b32.xlu0 %v1631, 32
  %v1634 = vpop.permute.xlu0 %1633
  %v1636 = vadd.f32 %v1626, %v1634
  %v1637 = vtanh.pop %v1636
  %1639 = vrot.lane.b32.xlu0 %v1637, 64
  %v1640 = vpop.permute.xlu0 %1639
  %v1642 = vmul.f32 %v1625, %v1640
  %1644 = vrot.lane.b32.xlu0 %v1642, 32
  %v1645 = vpop.permute.xlu0 %1644
  %s1647 = scalar_lea.vmem %s14, 8
  %1648 = vst.msk [vmem:[%s1647] sm:$0xff] %vm295, %v1645
  %1650 = vrot.lane.b32.xlu0 %v1636, 96
  %v1651 = vpop.permute.xlu0 %1650
  %s1653 = scalar_lea.vmem %s15, 8
  %1654 = vst.msk [vmem:[%s1653] sm:$0xff] %vm295, %v1651
  %v1655 = vpack.c.bf16 %v1642, %v1642
  %v1656 = vld [vmem:[%s9] sm:$0xf]
  %v1657 = vld [vmem:[%s9 + $0x4] sm:$0xf]
  %v1658 = vld [vmem:[%s9 + $0x8] sm:$0xf]
  %v1659 = vld [vmem:[%s9 + $0xc] sm:$0xf]
  %v1660 = vld [vmem:[%s10] sm:$0x1]
  %v1662 = vlaneseq
  %v1663 = vshrl.u32 %v1662, 7
  %v1664 = vsub.s32 0, %v1663
  %v1665 = vrot.slane %v1660, %v1664
  %1668 = vrot.lane.b32.xlu0 %v1655, 32
  %v1669 = vpop.permute.xlu0 %1668
  %v1674 = vunpack.c.l.b16 %v1656
  %v1675 = vunpack.c.l.b16 %v1657
  %v1676 = vunpack.c.l.b16 %v1658
  %v1677 = vunpack.c.l.b16 %v1659
  %v1678 = vpack.c.b16 %v1675, %v1674
  %v1679 = vpack.c.b16 %v1677, %v1676
  %v1683 = vsel %vm295, %v1669, 0
  %1685 = vmatprep.subr.bf16.mxu0 0
  %1686 = vmatpush1.bf16.msra.mxu0 %v1678
  %1687 = vmatprep.subr.bf16.mxu0 0
  %1688 = vmatpush1.bf16.msra.mxu0 %v1679
  %1689 = vmatprep.subr.bf16.mxu0 0
  %1690 = vmatpush1.bf16.msra.mxu0 0
  %1691 = vmatprep.subr.bf16.mxu0 0
  %1692 = vmatpush1.bf16.msra.mxu0 0
  %1693 = vmatprep.subr.bf16.mxu0 0
  %1694 = vmatpush1.bf16.msra.mxu0 0
  %1695 = vmatprep.subr.bf16.mxu0 0
  %1696 = vmatpush1.bf16.msra.mxu0 0
  %1697 = vmatprep.subr.bf16.mxu0 0
  %1698 = vmatpush1.bf16.msra.mxu0 0
  %1699 = vmatprep.subr.bf16.mxu0 0
  %1700 = vmatpush1.bf16.msra.mxu0 0
  %1701 = vmatprep.subr.bf16.mxu0 0
  %1702 = vmatpush1.bf16.msra.mxu0 0
  %1703 = vmatprep.subr.bf16.mxu0 0
  %1704 = vmatpush1.bf16.msra.mxu0 0
  %1705 = vmatprep.subr.bf16.mxu0 0
  %1706 = vmatpush1.bf16.msra.mxu0 0
  %1707 = vmatprep.subr.bf16.mxu0 0
  %1708 = vmatpush1.bf16.msra.mxu0 0
  %1709 = vmatprep.subr.bf16.mxu0 0
  %1710 = vmatpush1.bf16.msra.mxu0 0
  %1711 = vmatprep.subr.bf16.mxu0 0
  %1712 = vmatpush1.bf16.msra.mxu0 0
  %1713 = vmatprep.subr.bf16.mxu0 0
  %1714 = vmatpush1.bf16.msra.mxu0 0
  %1715 = vmatprep.subr.bf16.mxu0 0
  %1716 = vmatpush1.bf16.msra.mxu0 0
  %1717 = vmatprep.mubr.bf16.mxu0 0
  %1718 = vmatmul.mubr.bf16.gmra.mrb[0].mxu0 %v1683
  %v1719 = vpop.f32.mrb[0].mxu0
  %v1720 = vadd.f32 %v1665, %v1719
  %v1721 = vpop.f32.mrb[0].mxu0
  %v1722 = vpop.f32.mrb[0].mxu0
  %v1723 = vpop.f32.mrb[0].mxu0
  %1724 = vdwg.mxu0
  %1725 = vst [vmem:[%s13] sm:$0xff] %v1720
  // Predicated region
  $region54: #{enhanced_lstm_forward.1} parent=0 // pred_check
    _
  $region55: #{enhanced_lstm_forward.1} parent=0 // pred_check_branch
    %1727 = sbr.rel (0) target = $region57
  $region56: #{enhanced_lstm_forward.1} parent=0 // pred_region
    _
  $region57: #{enhanced_lstm_forward.1} parent=0 // pred_fallthru
    _
  // Predicated region
  $region58: #{enhanced_lstm_forward.1} parent=0 // pred_check
    _
  $region59: #{enhanced_lstm_forward.1} parent=0 // pred_check_branch
    %1729 = sbr.rel (0) target = $region61
  $region60: #{enhanced_lstm_forward.1} parent=0 // pred_region
    _
  $region61: #{enhanced_lstm_forward.1} parent=0 // pred_fallthru
    _
  // Predicated region
  $region62: #{enhanced_lstm_forward.1} parent=0 // pred_check
    _
  $region63: #{enhanced_lstm_forward.1} parent=0 // pred_check_branch
    %1731 = sbr.rel (0) target = $region65
  $region64: #{enhanced_lstm_forward.1} parent=0 // pred_region
    _
  $region65: #{enhanced_lstm_forward.1} parent=0 // pred_fallthru
    _
  // Predicated region
  $region66: #{enhanced_lstm_forward.1} parent=0 // pred_check
    _
  $region67: #{enhanced_lstm_forward.1} parent=0 // pred_check_branch
    %1733 = sbr.rel (0) target = $region69
  $region68: #{enhanced_lstm_forward.1} parent=0 // pred_region
    _
  $region69: #{enhanced_lstm_forward.1} parent=0 // pred_fallthru
    _
  // Predicated region
  $region70: #{enhanced_lstm_forward.1} parent=0 // pred_check
    _
  $region71: #{enhanced_lstm_forward.1} parent=0 // pred_check_branch
    %1735 = sbr.rel (0) target = $region73
  $region72: #{enhanced_lstm_forward.1} parent=0 // pred_region
    _
  $region73: #{enhanced_lstm_forward.1} parent=0 // pred_fallthru
    _
  // Predicated region
  $region74: #{enhanced_lstm_forward.1} parent=0 // pred_check
    _
  $region75: #{enhanced_lstm_forward.1} parent=0 // pred_check_branch
    %1737 = sbr.rel (0) target = $region77
  $region76: #{enhanced_lstm_forward.1} parent=0 // pred_region
    _
  $region77: #{enhanced_lstm_forward.1} parent=0 // pred_fallthru
    _

</llo_original>
